<compile_context>
chip_gen: v5e
topology: v5e:2x2
jax: 0.10.0
libtpu: 0.0.40
codegen_flags: <defaults>
</compile_context>

<pallas_src>
import jax
import jax.numpy as jnp
from jax.experimental import pallas as pl
from jax.experimental.pallas import tpu as pltpu


def _leaky_relu(x, slope=0.01):
    return jnp.where(x > 0, x, slope * x)


def discriminator_kernel(xi_ref, xl_ref, w1i_ref, w1l_ref, b1_ref,
                         w2_ref, b2_ref, w3_ref, b3_ref, o_ref):
    # f32 activation tiles streamed from HBM; cast to bf16 on the VPU right
    # before the MXU (cheap, and halves the HBM traffic vs a wrapper cast).
    xi = xi_ref[...].astype(jnp.bfloat16)
    xl = xl_ref[...].astype(jnp.bfloat16)

    # Layer 1: Linear(img_dim + label_dim -> 512), contraction split so the
    # lane-aligned image part and the small label part each hit the MXU
    # without padding the contraction dim.
    h = jnp.dot(xi, w1i_ref[...], preferred_element_type=jnp.float32)
    h = h + jnp.dot(xl, w1l_ref[...], preferred_element_type=jnp.float32)
    h = _leaky_relu(h + b1_ref[...])          # f32 elementwise on accumulator
    # Dropout -> identity (eval-mode forward).

    # Layer 2: Linear(512 -> 256); bf16 operands, f32 accumulation.
    h = jnp.dot(h.astype(jnp.bfloat16), w2_ref[...],
                preferred_element_type=jnp.float32)
    h = _leaky_relu(h + b2_ref[...])
    # Dropout -> identity (eval-mode forward).

    # Layer 3: Linear(256 -> 1) + Sigmoid as a lane reduction (VPU/XLU + EUP).
    logit = jnp.sum(h * w3_ref[...], axis=-1, keepdims=True) + b3_ref[...]
    o_ref[...] = jax.nn.sigmoid(logit)


def discriminator_forward(img, labels, params, *, block_b=1024):
    """img: [B, C, H, W] float32 (NCHW, flattened inside),
       labels: [B] int32 in [0, 10)."""
    B = img.shape[0]
    img_flat = img.reshape(B, -1)                         # free metadata reshape
    label_emb = params["embedding"][labels]               # tiny gather in glue
    img_dim = img_flat.shape[1]
    label_dim = label_emb.shape[1]

    # Activations stay f32 (cast to bf16 inside the kernel); weights -> bf16
    # once here (resident across the whole grid), biases / final vector f32.
    x_img = img_flat.astype(jnp.float32)
    x_lbl = label_emb.astype(jnp.float32)
    w1_img = params["w1"][:img_dim].astype(jnp.bfloat16)      # [img_dim, 512]
    w1_lbl = params["w1"][img_dim:].astype(jnp.bfloat16)      # [label_dim, 512]
    b1 = params["b1"].astype(jnp.float32)                     # [1, 512]
    w2 = params["w2"].astype(jnp.bfloat16)                    # [512, 256]
    b2 = params["b2"].astype(jnp.float32)                     # [1, 256]
    w3 = params["w3"].reshape(1, -1).astype(jnp.float32)      # [1, 256]
    b3 = params["b3"].reshape(1, 1).astype(jnp.float32)       # [1, 1]

    # Batch tile: multiple of 8 sublanes; pad B up to a tile multiple.
    tm = min(block_b, max(8, ((B + 7) // 8) * 8))
    b_pad = pl.cdiv(B, tm) * tm
    if b_pad != B:
        x_img = jnp.pad(x_img, ((0, b_pad - B), (0, 0)))
        x_lbl = jnp.pad(x_lbl, ((0, b_pad - B), (0, 0)))

    grid = (b_pad // tm,)

    def row_spec(d):      # batch-tiled activations / output
        return pl.BlockSpec((tm, d), lambda i: (i, 0))

    def res_spec(shape):  # weights/biases resident across grid steps
        return pl.BlockSpec(shape, lambda i: (0, 0))

    flops = 2 * b_pad * (img_dim * 512 + label_dim * 512 + 512 * 256 + 256)
    bytes_accessed = (
        (w1_img.size + w1_lbl.size + w2.size) * 2           # bf16 weights
        + (b1.size + b2.size + w3.size + b3.size) * 4       # f32 bias/vec
        + b_pad * (img_dim + label_dim) * 4                 # f32 activations in
        + b_pad * 4)                                        # f32 output
    cost = pl.CostEstimate(flops=flops, transcendentals=b_pad,
                           bytes_accessed=bytes_accessed)

    out = pl.pallas_call(
        discriminator_kernel,
        out_shape=jax.ShapeDtypeStruct((b_pad, 1), jnp.float32),
        grid=grid,
        in_specs=[
            row_spec(img_dim), row_spec(label_dim),
            res_spec(w1_img.shape), res_spec(w1_lbl.shape), res_spec(b1.shape),
            res_spec(w2.shape), res_spec(b2.shape),
            res_spec(w3.shape), res_spec(b3.shape),
        ],
        out_specs=pl.BlockSpec((tm, 1), lambda i: (i, 0)),
        compiler_params=pltpu.CompilerParams(
            dimension_semantics=("parallel",),
            vmem_limit_bytes=32 * 1024 * 1024),
        cost_estimate=cost,
    )(x_img, x_lbl, w1_img, w1_lbl, b1, w2, b2, w3, b3)
    return out[:B]


def init_params(key, img_dim, label_dim):
    ks = jax.random.split(key, 7)

    def lin(kw, kb, fan_in, fan_out):
        # Deterministic synthetic init (PyTorch-like uniform bound).
        # NOTE: stored [in, out] (x @ W); real nn.Linear checkpoints ([out, in])
        # must be transposed before loading.
        bound = 1.0 / jnp.sqrt(fan_in)
        w = jax.random.uniform(kw, (fan_in, fan_out), jnp.float32, -bound, bound)
        b = jax.random.uniform(kb, (1, fan_out), jnp.float32, -bound, bound)
        return w, b

    emb = jax.random.normal(ks[0], (10, label_dim), jnp.float32)
    w1, b1 = lin(ks[1], ks[2], img_dim + label_dim, 512)
    w2, b2 = lin(ks[3], ks[4], 512, 256)
    w3, b3 = lin(ks[5], ks[6], 256, 1)
    return {"embedding": emb, "w1": w1, "b1": b1, "w2": w2, "b2": b2,
            "w3": w3, "b3": b3}


def ref_forward(img, labels, params):
    """Plain-JAX reference (eval-mode dropout == identity) with the same
    bf16 rounding of activations/weights that the kernel applies."""
    B = img.shape[0]
    x = jnp.concatenate([img.reshape(B, -1), params["embedding"][labels]],
                        axis=-1)
    x = x.astype(jnp.bfloat16).astype(jnp.float32)
    w1 = params["w1"].astype(jnp.bfloat16).astype(jnp.float32)
    w2 = params["w2"].astype(jnp.bfloat16).astype(jnp.float32)
    h = x @ w1 + params["b1"]
    h = jnp.where(h > 0, h, 0.01 * h)
    h = h.astype(jnp.bfloat16).astype(jnp.float32) @ w2 + params["b2"]
    h = jnp.where(h > 0, h, 0.01 * h)
    logit = jnp.sum(h * params["w3"].reshape(1, -1), axis=-1, keepdims=True)
    logit = logit + params["b3"].reshape(1, 1)
    return jax.nn.sigmoid(logit)


if __name__ == "__main__":
    key = jax.random.PRNGKey(0)
    k_img, k_lbl, k_par = jax.random.split(key, 3)

    B, C, H, W = 2, 4, 16, 16
    img_dim = C * H * W          # 1024 (lane-aligned)
    label_dim = 32

    img = jax.random.normal(k_img, (B, C, H, W), jnp.float32)
    labels = jax.random.randint(k_lbl, (B,), 0, 10, jnp.int32)
    params = init_params(k_par, img_dim, label_dim)

    fwd = jax.jit(discriminator_forward)
    validity = jax.block_until_ready(fwd(img, labels, params))

    ref = ref_forward(img, labels, params)

    assert validity.shape == (B, 1), validity.shape
    assert jnp.allclose(validity, ref, atol=2e-3, rtol=2e-3), (validity, ref)
    print("KERNEL_OK")
</pallas_src>

<mosaic_0001>
module attributes {stable_mosaic.version = 11 : i64} {
  func.func @discriminator_kernel(%arg0: i32, %arg1: memref<8x1024xf32, #tpu.memory_space<vmem>>, %arg2: memref<8x32xf32, #tpu.memory_space<vmem>>, %arg3: memref<1024x512xbf16, #tpu.memory_space<vmem>>, %arg4: memref<32x512xbf16, #tpu.memory_space<vmem>>, %arg5: memref<1x512xf32, #tpu.memory_space<vmem>>, %arg6: memref<512x256xbf16, #tpu.memory_space<vmem>>, %arg7: memref<1x256xf32, #tpu.memory_space<vmem>>, %arg8: memref<1x256xf32, #tpu.memory_space<vmem>>, %arg9: memref<1x1xf32, #tpu.memory_space<vmem>>, %arg10: memref<8x1xf32, #tpu.memory_space<vmem>>) attributes {dimension_semantics = [#tpu.dimension_semantics<parallel>], iteration_bounds = array<i64: 1>, scalar_prefetch = 0 : i64, scratch_operands = 0 : i64, tpu.core_type = #tpu.core_type<tc>, window_params = [{transform_indices = @transform_0, window_bounds = array<i64: 8, 1024>}, {transform_indices = @transform_1, window_bounds = array<i64: 8, 32>}, {pipeline_mode = #tpu.pipeline_mode<synchronous>, transform_indices = @transform_2, window_bounds = array<i64: 1024, 512>}, {pipeline_mode = #tpu.pipeline_mode<synchronous>, transform_indices = @transform_3, window_bounds = array<i64: 32, 512>}, {pipeline_mode = #tpu.pipeline_mode<synchronous>, transform_indices = @transform_4, window_bounds = array<i64: 1, 512>}, {pipeline_mode = #tpu.pipeline_mode<synchronous>, transform_indices = @transform_5, window_bounds = array<i64: 512, 256>}, {pipeline_mode = #tpu.pipeline_mode<synchronous>, transform_indices = @transform_6, window_bounds = array<i64: 1, 256>}, {pipeline_mode = #tpu.pipeline_mode<synchronous>, transform_indices = @transform_7, window_bounds = array<i64: 1, 256>}, {pipeline_mode = #tpu.pipeline_mode<synchronous>, transform_indices = @transform_8, window_bounds = array<i64: 1, 1>}, {transform_indices = @transform_9, window_bounds = array<i64: 8, 1>}]} {
    %c0 = arith.constant 0 : index
    %c0_0 = arith.constant 0 : index
    %0 = vector.load %arg1[%c0, %c0_0] : memref<8x1024xf32, #tpu.memory_space<vmem>>, vector<8x1024xf32>
    %1 = arith.truncf %0 : vector<8x1024xf32> to vector<8x1024xbf16>
    %c0_1 = arith.constant 0 : index
    %c0_2 = arith.constant 0 : index
    %2 = vector.load %arg2[%c0_1, %c0_2] : memref<8x32xf32, #tpu.memory_space<vmem>>, vector<8x32xf32>
    %3 = arith.truncf %2 : vector<8x32xf32> to vector<8x32xbf16>
    %c0_3 = arith.constant 0 : index
    %c0_4 = arith.constant 0 : index
    %4 = vector.load %arg3[%c0_3, %c0_4] : memref<1024x512xbf16, #tpu.memory_space<vmem>>, vector<1024x512xbf16>
    %cst = arith.constant dense<0.000000e+00> : vector<8x512xf32>
    %5 = tpu.matmul %1, %4, %cst {dimension_numbers = #tpu.dot_dimension_numbers<[1], [0], [0], [1], [0, 0, 1, 1], [], []>} : vector<8x1024xbf16>, vector<1024x512xbf16>, vector<8x512xf32> -> vector<8x512xf32>
    %c0_5 = arith.constant 0 : index
    %c0_6 = arith.constant 0 : index
    %6 = vector.load %arg4[%c0_5, %c0_6] : memref<32x512xbf16, #tpu.memory_space<vmem>>, vector<32x512xbf16>
    %cst_7 = arith.constant dense<0.000000e+00> : vector<8x512xf32>
    %7 = tpu.matmul %3, %6, %cst_7 {dimension_numbers = #tpu.dot_dimension_numbers<[1], [0], [0], [1], [0, 0, 1, 1], [], []>} : vector<8x32xbf16>, vector<32x512xbf16>, vector<8x512xf32> -> vector<8x512xf32>
    %8 = arith.addf %5, %7 : vector<8x512xf32>
    %c0_8 = arith.constant 0 : index
    %c0_9 = arith.constant 0 : index
    %9 = vector.load %arg5[%c0_8, %c0_9] : memref<1x512xf32, #tpu.memory_space<vmem>>, vector<1x512xf32>
    %10 = vector.broadcast %9 : vector<1x512xf32> to vector<8x512xf32>
    %11 = arith.addf %8, %10 : vector<8x512xf32>
    %cst_10 = arith.constant 0.000000e+00 : f32
    %12 = vector.broadcast %cst_10 : f32 to vector<8x512xf32>
    %13 = arith.cmpf ogt, %11, %12 : vector<8x512xf32>
    %cst_11 = arith.constant 0.00999999977 : f32
    %14 = vector.broadcast %cst_11 : f32 to vector<8x512xf32>
    %15 = arith.mulf %14, %11 : vector<8x512xf32>
    %16 = arith.select %13, %11, %15 : vector<8x512xi1>, vector<8x512xf32>
    %17 = arith.truncf %16 : vector<8x512xf32> to vector<8x512xbf16>
    %c0_12 = arith.constant 0 : index
    %c0_13 = arith.constant 0 : index
    %18 = vector.load %arg6[%c0_12, %c0_13] : memref<512x256xbf16, #tpu.memory_space<vmem>>, vector<512x256xbf16>
    %cst_14 = arith.constant dense<0.000000e+00> : vector<8x256xf32>
    %19 = tpu.matmul %17, %18, %cst_14 {dimension_numbers = #tpu.dot_dimension_numbers<[1], [0], [0], [1], [0, 0, 1, 1], [], []>} : vector<8x512xbf16>, vector<512x256xbf16>, vector<8x256xf32> -> vector<8x256xf32>
    %c0_15 = arith.constant 0 : index
    %c0_16 = arith.constant 0 : index
    %20 = vector.load %arg7[%c0_15, %c0_16] : memref<1x256xf32, #tpu.memory_space<vmem>>, vector<1x256xf32>
    %21 = vector.broadcast %20 : vector<1x256xf32> to vector<8x256xf32>
    %22 = arith.addf %19, %21 : vector<8x256xf32>
    %cst_17 = arith.constant 0.000000e+00 : f32
    %23 = vector.broadcast %cst_17 : f32 to vector<8x256xf32>
    %24 = arith.cmpf ogt, %22, %23 : vector<8x256xf32>
    %cst_18 = arith.constant 0.00999999977 : f32
    %25 = vector.broadcast %cst_18 : f32 to vector<8x256xf32>
    %26 = arith.mulf %25, %22 : vector<8x256xf32>
    %27 = arith.select %24, %22, %26 : vector<8x256xi1>, vector<8x256xf32>
    %c0_19 = arith.constant 0 : index
    %c0_20 = arith.constant 0 : index
    %28 = vector.load %arg8[%c0_19, %c0_20] : memref<1x256xf32, #tpu.memory_space<vmem>>, vector<1x256xf32>
    %29 = vector.broadcast %28 : vector<1x256xf32> to vector<8x256xf32>
    %30 = arith.mulf %27, %29 : vector<8x256xf32>
    %cst_21 = arith.constant dense<0.000000e+00> : vector<8xf32>
    %31 = vector.multi_reduction <add>, %30, %cst_21 [1] : vector<8x256xf32> to vector<8xf32>
    %32 = vector.shape_cast %31 : vector<8xf32> to vector<8x1xf32>
    %c0_22 = arith.constant 0 : index
    %c0_23 = arith.constant 0 : index
    %33 = vector.load %arg9[%c0_22, %c0_23] : memref<1x1xf32, #tpu.memory_space<vmem>>, vector<1x1xf32>
    %34 = vector.broadcast %33 : vector<1x1xf32> to vector<8x1xf32>
    %35 = arith.addf %32, %34 : vector<8x1xf32>
    %36 = arith.negf %35 : vector<8x1xf32>
    %37 = math.exp %36 : vector<8x1xf32>
    %cst_24 = arith.constant 1.000000e+00 : f32
    %38 = vector.broadcast %cst_24 : f32 to vector<8x1xf32>
    %39 = arith.addf %38, %37 : vector<8x1xf32>
    %40 = arith.divf %38, %39 : vector<8x1xf32>
    %c0_25 = arith.constant 0 : index
    %c0_26 = arith.constant 0 : index
    %41 = vector.load %arg10[%c0_25, %c0_26] : memref<8x1xf32, #tpu.memory_space<vmem>>, vector<8x1xf32>
    tpu.vector_store %arg10[%c0_25, %c0_26], %40 {strides = array<i32>} : memref<8x1xf32, #tpu.memory_space<vmem>>, vector<8x1xf32>,
    return
  }
  func.func @transform_0(%arg0: i32) -> (i32, i32) {
    %c0_i32 = arith.constant 0 : i32
    %c0_i32_0 = arith.constant 0 : i32
    return %arg0, %c0_i32 : i32, i32
  }
  func.func @transform_1(%arg0: i32) -> (i32, i32) {
    %c0_i32 = arith.constant 0 : i32
    %c0_i32_0 = arith.constant 0 : i32
    return %arg0, %c0_i32 : i32, i32
  }
  func.func @transform_2(%arg0: i32) -> (i32, i32) {
    %c0_i32 = arith.constant 0 : i32
    %c0_i32_0 = arith.constant 0 : i32
    %c0_i32_1 = arith.constant 0 : i32
    return %c0_i32, %c0_i32_0 : i32, i32
  }
  func.func @transform_3(%arg0: i32) -> (i32, i32) {
    %c0_i32 = arith.constant 0 : i32
    %c0_i32_0 = arith.constant 0 : i32
    %c0_i32_1 = arith.constant 0 : i32
    return %c0_i32, %c0_i32_0 : i32, i32
  }
  func.func @transform_4(%arg0: i32) -> (i32, i32) {
    %c0_i32 = arith.constant 0 : i32
    %c0_i32_0 = arith.constant 0 : i32
    %c0_i32_1 = arith.constant 0 : i32
    return %c0_i32, %c0_i32_0 : i32, i32
  }
  func.func @transform_5(%arg0: i32) -> (i32, i32) {
    %c0_i32 = arith.constant 0 : i32
    %c0_i32_0 = arith.constant 0 : i32
    %c0_i32_1 = arith.constant 0 : i32
    return %c0_i32, %c0_i32_0 : i32, i32
  }
  func.func @transform_6(%arg0: i32) -> (i32, i32) {
    %c0_i32 = arith.constant 0 : i32
    %c0_i32_0 = arith.constant 0 : i32
    %c0_i32_1 = arith.constant 0 : i32
    return %c0_i32, %c0_i32_0 : i32, i32
  }
  func.func @transform_7(%arg0: i32) -> (i32, i32) {
    %c0_i32 = arith.constant 0 : i32
    %c0_i32_0 = arith.constant 0 : i32
    %c0_i32_1 = arith.constant 0 : i32
    return %c0_i32, %c0_i32_0 : i32, i32
  }
  func.func @transform_8(%arg0: i32) -> (i32, i32) {
    %c0_i32 = arith.constant 0 : i32
    %c0_i32_0 = arith.constant 0 : i32
    %c0_i32_1 = arith.constant 0 : i32
    return %c0_i32, %c0_i32_0 : i32, i32
  }
  func.func @transform_9(%arg0: i32) -> (i32, i32) {
    %c0_i32 = arith.constant 0 : i32
    %c0_i32_0 = arith.constant 0 : i32
    return %arg0, %c0_i32 : i32, i32
  }
}

</mosaic_0001>

<llo_original>
// kernel: discriminator_forward.1
$region0: #{discriminator_forward.1}
  #allocation0 [shape = 'u32[]', space=smem, size = 0x4, offset = 0x4, fixed_abs, tag = 'smem constant byte address 0x4 - core index']
  #allocation1 [shape = 'u32[72,128]{1,0:T(1,128)}', space=vmem, size = 0x9000, scoped, tag = 'internal scratch']
  #allocation2 [shape = 'f32[1,1]{1,0:T(1,128)S(1)}', space=vmem, size = 0x200, scoped, tag = 'scoped memory for discriminator_forward.1']
  %s0 = inlined_call_operand.vmem [shape: f32[8,1024], index: 0, kind: input, shape index: {}]
  %s1 = inlined_call_operand.vmem [shape: f32[8,32], index: 1, kind: input, shape index: {}]
  %s2 = inlined_call_operand.vmem [shape: bf16[1024,512], index: 2, kind: input, shape index: {}]
  %s3 = inlined_call_operand.vmem [shape: bf16[32,512], index: 3, kind: input, shape index: {}]
  %s4 = inlined_call_operand.vmem [shape: f32[1,512], index: 4, kind: input, shape index: {}]
  %s5 = inlined_call_operand.vmem [shape: bf16[512,256], index: 5, kind: input, shape index: {}]
  %s6 = inlined_call_operand.vmem [shape: f32[1,256], index: 6, kind: input, shape index: {}]
  %s7 = inlined_call_operand.vmem [shape: f32[1,256], index: 7, kind: input, shape index: {}]
  %s8 = inlined_call_operand.<no memory space> [shape: f32[1,1], index: 8, kind: input, shape index: {}]
  %s9 = inlined_call_operand.vmem [shape: f32[8,1], index: 9, kind: output, shape index: {}]
  %s10 = sld [smem:[#allocation0]]
  $region46: #{discriminator_forward.1} parent=0
    _
  %s12 = ssub.s32 1, %s10
  %s13 = scalar_select 0, %s12, %s10
  %v14 = vstv %s8
  %15 = vst [vmem:[#allocation2] sm:$0x1] %v14
  // Predicated region
  $region2: #{discriminator_forward.1} parent=0 // pred_check
    _
  $region3: #{discriminator_forward.1} parent=0 // pred_check_branch
    %17 = sbr.rel (0) target = $region5
  $region4: #{discriminator_forward.1} parent=0 // pred_region
    _
  $region5: #{discriminator_forward.1} parent=0 // pred_fallthru
    _
  // Predicated region
  $region6: #{discriminator_forward.1} parent=0 // pred_check
    _
  $region7: #{discriminator_forward.1} parent=0 // pred_check_branch
    %19 = sbr.rel (0) target = $region9
  $region8: #{discriminator_forward.1} parent=0 // pred_region
    _
  $region9: #{discriminator_forward.1} parent=0 // pred_fallthru
    _
  // Predicated region
  $region10: #{discriminator_forward.1} parent=0 // pred_check
    _
  $region11: #{discriminator_forward.1} parent=0 // pred_check_branch
    %21 = sbr.rel (0) target = $region13
  $region12: #{discriminator_forward.1} parent=0 // pred_region
    _
  $region13: #{discriminator_forward.1} parent=0 // pred_fallthru
    _
  // Predicated region
  $region14: #{discriminator_forward.1} parent=0 // pred_check
    _
  $region15: #{discriminator_forward.1} parent=0 // pred_check_branch
    %23 = sbr.rel (0) target = $region17
  $region16: #{discriminator_forward.1} parent=0 // pred_region
    _
  $region17: #{discriminator_forward.1} parent=0 // pred_fallthru
    _
  // Predicated region
  $region18: #{discriminator_forward.1} parent=0 // pred_check
    _
  $region19: #{discriminator_forward.1} parent=0 // pred_check_branch
    %25 = sbr.rel (0) target = $region21
  $region20: #{discriminator_forward.1} parent=0 // pred_region
    _
  $region21: #{discriminator_forward.1} parent=0 // pred_fallthru
    _
  // Predicated region
  $region22: #{discriminator_forward.1} parent=0 // pred_check
    _
  $region23: #{discriminator_forward.1} parent=0 // pred_check_branch
    %27 = sbr.rel (0) target = $region25
  $region24: #{discriminator_forward.1} parent=0 // pred_region
    _
  $region25: #{discriminator_forward.1} parent=0 // pred_fallthru
    _
  // Predicated region
  $region26: #{discriminator_forward.1} parent=0 // pred_check
    _
  $region27: #{discriminator_forward.1} parent=0 // pred_check_branch
    %29 = sbr.rel (0) target = $region29
  $region28: #{discriminator_forward.1} parent=0 // pred_region
    _
  $region29: #{discriminator_forward.1} parent=0 // pred_fallthru
    _
  // Predicated region
  $region30: #{discriminator_forward.1} parent=0 // pred_check
    _
  $region31: #{discriminator_forward.1} parent=0 // pred_check_branch
    %31 = sbr.rel (0) target = $region33
  $region32: #{discriminator_forward.1} parent=0 // pred_region
    _
  $region33: #{discriminator_forward.1} parent=0 // pred_fallthru
    _
  // Predicated region
  $region34: #{discriminator_forward.1} parent=0 // pred_check
    _
  $region35: #{discriminator_forward.1} parent=0 // pred_check_branch
    %33 = sbr.rel (0) target = $region37
  $region36: #{discriminator_forward.1} parent=0 // pred_region
    _
  $region37: #{discriminator_forward.1} parent=0 // pred_fallthru
    _
  %v35 = vld [vmem:[%s0] sm:$0xff]
  %v36 = vld [vmem:[%s0 + $0x8] sm:$0xff]
  %v37 = vld [vmem:[%s0 + $0x10] sm:$0xff]
  %v38 = vld [vmem:[%s0 + $0x18] sm:$0xff]
  %v39 = vld [vmem:[%s0 + $0x20] sm:$0xff]
  %v40 = vld [vmem:[%s0 + $0x28] sm:$0xff]
  %v41 = vld [vmem:[%s0 + $0x30] sm:$0xff]
  %v42 = vld [vmem:[%s0 + $0x38] sm:$0xff]
  %v43 = vpack.c.bf16 %v35, %v35
  %v44 = vpack.c.bf16 %v36, %v36
  %v45 = vpack.c.bf16 %v37, %v37
  %v46 = vpack.c.bf16 %v38, %v38
  %v47 = vpack.c.bf16 %v39, %v39
  %v48 = vpack.c.bf16 %v40, %v40
  %v49 = vpack.c.bf16 %v41, %v41
  %v50 = vpack.c.bf16 %v42, %v42
  %v51 = vld [vmem:[%s1] sm:$0xff]
  %v52 = vpack.c.bf16 %v51, %v51
  %v53 = vld [vmem:[%s2] sm:$0xff]
  %v54 = vld [vmem:[%s2 + $0x8] sm:$0xff]
  %v55 = vld [vmem:[%s2 + $0x10] sm:$0xff]
  %v56 = vld [vmem:[%s2 + $0x18] sm:$0xff]
  %v57 = vld [vmem:[%s2 + $0x20] sm:$0xff]
  %v58 = vld [vmem:[%s2 + $0x28] sm:$0xff]
  %v59 = vld [vmem:[%s2 + $0x30] sm:$0xff]
  %v60 = vld [vmem:[%s2 + $0x38] sm:$0xff]
  %v61 = vld [vmem:[%s2 + $0x40] sm:$0xff]
  %v62 = vld [vmem:[%s2 + $0x48] sm:$0xff]
  %v63 = vld [vmem:[%s2 + $0x50] sm:$0xff]
  %v64 = vld [vmem:[%s2 + $0x58] sm:$0xff]
  %v65 = vld [vmem:[%s2 + $0x60] sm:$0xff]
  %v66 = vld [vmem:[%s2 + $0x68] sm:$0xff]
  %v67 = vld [vmem:[%s2 + $0x70] sm:$0xff]
  %v68 = vld [vmem:[%s2 + $0x78] sm:$0xff]
  %v69 = vld [vmem:[%s2 + $0x80] sm:$0xff]
  %v70 = vld [vmem:[%s2 + $0x88] sm:$0xff]
  %v71 = vld [vmem:[%s2 + $0x90] sm:$0xff]
  %v72 = vld [vmem:[%s2 + $0x98] sm:$0xff]
  %v73 = vld [vmem:[%s2 + $0xa0] sm:$0xff]
  %v74 = vld [vmem:[%s2 + $0xa8] sm:$0xff]
  %v75 = vld [vmem:[%s2 + $0xb0] sm:$0xff]
  %v76 = vld [vmem:[%s2 + $0xb8] sm:$0xff]
  %v77 = vld [vmem:[%s2 + $0xc0] sm:$0xff]
  %v78 = vld [vmem:[%s2 + $0xc8] sm:$0xff]
  %v79 = vld [vmem:[%s2 + $0xd0] sm:$0xff]
  %v80 = vld [vmem:[%s2 + $0xd8] sm:$0xff]
  %v81 = vld [vmem:[%s2 + $0xe0] sm:$0xff]
  %v82 = vld [vmem:[%s2 + $0xe8] sm:$0xff]
  %v83 = vld [vmem:[%s2 + $0xf0] sm:$0xff]
  %v84 = vld [vmem:[%s2 + $0xf8] sm:$0xff]
  %v85 = vld [vmem:[%s2 + $0x100] sm:$0xff]
  %v86 = vld [vmem:[%s2 + $0x108] sm:$0xff]
  %v87 = vld [vmem:[%s2 + $0x110] sm:$0xff]
  %v88 = vld [vmem:[%s2 + $0x118] sm:$0xff]
  %v89 = vld [vmem:[%s2 + $0x120] sm:$0xff]
  %v90 = vld [vmem:[%s2 + $0x128] sm:$0xff]
  %v91 = vld [vmem:[%s2 + $0x130] sm:$0xff]
  %v92 = vld [vmem:[%s2 + $0x138] sm:$0xff]
  %v93 = vld [vmem:[%s2 + $0x140] sm:$0xff]
  %v94 = vld [vmem:[%s2 + $0x148] sm:$0xff]
  %v95 = vld [vmem:[%s2 + $0x150] sm:$0xff]
  %v96 = vld [vmem:[%s2 + $0x158] sm:$0xff]
  %v97 = vld [vmem:[%s2 + $0x160] sm:$0xff]
  %v98 = vld [vmem:[%s2 + $0x168] sm:$0xff]
  %v99 = vld [vmem:[%s2 + $0x170] sm:$0xff]
  %v100 = vld [vmem:[%s2 + $0x178] sm:$0xff]
  %v101 = vld [vmem:[%s2 + $0x180] sm:$0xff]
  %v102 = vld [vmem:[%s2 + $0x188] sm:$0xff]
  %v103 = vld [vmem:[%s2 + $0x190] sm:$0xff]
  %v104 = vld [vmem:[%s2 + $0x198] sm:$0xff]
  %v105 = vld [vmem:[%s2 + $0x1a0] sm:$0xff]
  %v106 = vld [vmem:[%s2 + $0x1a8] sm:$0xff]
  %v107 = vld [vmem:[%s2 + $0x1b0] sm:$0xff]
  %v108 = vld [vmem:[%s2 + $0x1b8] sm:$0xff]
  %v109 = vld [vmem:[%s2 + $0x1c0] sm:$0xff]
  %v110 = vld [vmem:[%s2 + $0x1c8] sm:$0xff]
  %v111 = vld [vmem:[%s2 + $0x1d0] sm:$0xff]
  %v112 = vld [vmem:[%s2 + $0x1d8] sm:$0xff]
  %v113 = vld [vmem:[%s2 + $0x1e0] sm:$0xff]
  %v114 = vld [vmem:[%s2 + $0x1e8] sm:$0xff]
  %v115 = vld [vmem:[%s2 + $0x1f0] sm:$0xff]
  %v116 = vld [vmem:[%s2 + $0x1f8] sm:$0xff]
  %v117 = vld [vmem:[%s2 + $0x200] sm:$0xff]
  %v118 = vld [vmem:[%s2 + $0x208] sm:$0xff]
  %v119 = vld [vmem:[%s2 + $0x210] sm:$0xff]
  %v120 = vld [vmem:[%s2 + $0x218] sm:$0xff]
  %v121 = vld [vmem:[%s2 + $0x220] sm:$0xff]
  %v122 = vld [vmem:[%s2 + $0x228] sm:$0xff]
  %v123 = vld [vmem:[%s2 + $0x230] sm:$0xff]
  %v124 = vld [vmem:[%s2 + $0x238] sm:$0xff]
  %v125 = vld [vmem:[%s2 + $0x240] sm:$0xff]
  %v126 = vld [vmem:[%s2 + $0x248] sm:$0xff]
  %v127 = vld [vmem:[%s2 + $0x250] sm:$0xff]
  %v128 = vld [vmem:[%s2 + $0x258] sm:$0xff]
  %v129 = vld [vmem:[%s2 + $0x260] sm:$0xff]
  %v130 = vld [vmem:[%s2 + $0x268] sm:$0xff]
  %v131 = vld [vmem:[%s2 + $0x270] sm:$0xff]
  %v132 = vld [vmem:[%s2 + $0x278] sm:$0xff]
  %v133 = vld [vmem:[%s2 + $0x280] sm:$0xff]
  %v134 = vld [vmem:[%s2 + $0x288] sm:$0xff]
  %v135 = vld [vmem:[%s2 + $0x290] sm:$0xff]
  %v136 = vld [vmem:[%s2 + $0x298] sm:$0xff]
  %v137 = vld [vmem:[%s2 + $0x2a0] sm:$0xff]
  %v138 = vld [vmem:[%s2 + $0x2a8] sm:$0xff]
  %v139 = vld [vmem:[%s2 + $0x2b0] sm:$0xff]
  %v140 = vld [vmem:[%s2 + $0x2b8] sm:$0xff]
  %v141 = vld [vmem:[%s2 + $0x2c0] sm:$0xff]
  %v142 = vld [vmem:[%s2 + $0x2c8] sm:$0xff]
  %v143 = vld [vmem:[%s2 + $0x2d0] sm:$0xff]
  %v144 = vld [vmem:[%s2 + $0x2d8] sm:$0xff]
  %v145 = vld [vmem:[%s2 + $0x2e0] sm:$0xff]
  %v146 = vld [vmem:[%s2 + $0x2e8] sm:$0xff]
  %v147 = vld [vmem:[%s2 + $0x2f0] sm:$0xff]
  %v148 = vld [vmem:[%s2 + $0x2f8] sm:$0xff]
  %v149 = vld [vmem:[%s2 + $0x300] sm:$0xff]
  %v150 = vld [vmem:[%s2 + $0x308] sm:$0xff]
  %v151 = vld [vmem:[%s2 + $0x310] sm:$0xff]
  %v152 = vld [vmem:[%s2 + $0x318] sm:$0xff]
  %v153 = vld [vmem:[%s2 + $0x320] sm:$0xff]
  %v154 = vld [vmem:[%s2 + $0x328] sm:$0xff]
  %v155 = vld [vmem:[%s2 + $0x330] sm:$0xff]
  %v156 = vld [vmem:[%s2 + $0x338] sm:$0xff]
  %v157 = vld [vmem:[%s2 + $0x340] sm:$0xff]
  %v158 = vld [vmem:[%s2 + $0x348] sm:$0xff]
  %v159 = vld [vmem:[%s2 + $0x350] sm:$0xff]
  %v160 = vld [vmem:[%s2 + $0x358] sm:$0xff]
  %v161 = vld [vmem:[%s2 + $0x360] sm:$0xff]
  %v162 = vld [vmem:[%s2 + $0x368] sm:$0xff]
  %v163 = vld [vmem:[%s2 + $0x370] sm:$0xff]
  %v164 = vld [vmem:[%s2 + $0x378] sm:$0xff]
  %v165 = vld [vmem:[%s2 + $0x380] sm:$0xff]
  %v166 = vld [vmem:[%s2 + $0x388] sm:$0xff]
  %v167 = vld [vmem:[%s2 + $0x390] sm:$0xff]
  %v168 = vld [vmem:[%s2 + $0x398] sm:$0xff]
  %v169 = vld [vmem:[%s2 + $0x3a0] sm:$0xff]
  %v170 = vld [vmem:[%s2 + $0x3a8] sm:$0xff]
  %v171 = vld [vmem:[%s2 + $0x3b0] sm:$0xff]
  %v172 = vld [vmem:[%s2 + $0x3b8] sm:$0xff]
  %v173 = vld [vmem:[%s2 + $0x3c0] sm:$0xff]
  %v174 = vld [vmem:[%s2 + $0x3c8] sm:$0xff]
  %v175 = vld [vmem:[%s2 + $0x3d0] sm:$0xff]
  %v176 = vld [vmem:[%s2 + $0x3d8] sm:$0xff]
  %v177 = vld [vmem:[%s2 + $0x3e0] sm:$0xff]
  %v178 = vld [vmem:[%s2 + $0x3e8] sm:$0xff]
  %v179 = vld [vmem:[%s2 + $0x3f0] sm:$0xff]
  %v180 = vld [vmem:[%s2 + $0x3f8] sm:$0xff]
  %v181 = vld [vmem:[%s2 + $0x400] sm:$0xff]
  %v182 = vld [vmem:[%s2 + $0x408] sm:$0xff]
  %v183 = vld [vmem:[%s2 + $0x410] sm:$0xff]
  %v184 = vld [vmem:[%s2 + $0x418] sm:$0xff]
  %v185 = vld [vmem:[%s2 + $0x420] sm:$0xff]
  %v186 = vld [vmem:[%s2 + $0x428] sm:$0xff]
  %v187 = vld [vmem:[%s2 + $0x430] sm:$0xff]
  %v188 = vld [vmem:[%s2 + $0x438] sm:$0xff]
  %v189 = vld [vmem:[%s2 + $0x440] sm:$0xff]
  %v190 = vld [vmem:[%s2 + $0x448] sm:$0xff]
  %v191 = vld [vmem:[%s2 + $0x450] sm:$0xff]
  %v192 = vld [vmem:[%s2 + $0x458] sm:$0xff]
  %v193 = vld [vmem:[%s2 + $0x460] sm:$0xff]
  %v194 = vld [vmem:[%s2 + $0x468] sm:$0xff]
  %v195 = vld [vmem:[%s2 + $0x470] sm:$0xff]
  %v196 = vld [vmem:[%s2 + $0x478] sm:$0xff]
  %v197 = vld [vmem:[%s2 + $0x480] sm:$0xff]
  %v198 = vld [vmem:[%s2 + $0x488] sm:$0xff]
  %v199 = vld [vmem:[%s2 + $0x490] sm:$0xff]
  %v200 = vld [vmem:[%s2 + $0x498] sm:$0xff]
  %v201 = vld [vmem:[%s2 + $0x4a0] sm:$0xff]
  %v202 = vld [vmem:[%s2 + $0x4a8] sm:$0xff]
  %v203 = vld [vmem:[%s2 + $0x4b0] sm:$0xff]
  %v204 = vld [vmem:[%s2 + $0x4b8] sm:$0xff]
  %v205 = vld [vmem:[%s2 + $0x4c0] sm:$0xff]
  %v206 = vld [vmem:[%s2 + $0x4c8] sm:$0xff]
  %v207 = vld [vmem:[%s2 + $0x4d0] sm:$0xff]
  %v208 = vld [vmem:[%s2 + $0x4d8] sm:$0xff]
  %v209 = vld [vmem:[%s2 + $0x4e0] sm:$0xff]
  %v210 = vld [vmem:[%s2 + $0x4e8] sm:$0xff]
  %v211 = vld [vmem:[%s2 + $0x4f0] sm:$0xff]
  %v212 = vld [vmem:[%s2 + $0x4f8] sm:$0xff]
  %v213 = vld [vmem:[%s2 + $0x500] sm:$0xff]
  %v214 = vld [vmem:[%s2 + $0x508] sm:$0xff]
  %v215 = vld [vmem:[%s2 + $0x510] sm:$0xff]
  %v216 = vld [vmem:[%s2 + $0x518] sm:$0xff]
  %v217 = vld [vmem:[%s2 + $0x520] sm:$0xff]
  %v218 = vld [vmem:[%s2 + $0x528] sm:$0xff]
  %v219 = vld [vmem:[%s2 + $0x530] sm:$0xff]
  %v220 = vld [vmem:[%s2 + $0x538] sm:$0xff]
  %v221 = vld [vmem:[%s2 + $0x540] sm:$0xff]
  %v222 = vld [vmem:[%s2 + $0x548] sm:$0xff]
  %v223 = vld [vmem:[%s2 + $0x550] sm:$0xff]
  %v224 = vld [vmem:[%s2 + $0x558] sm:$0xff]
  %v225 = vld [vmem:[%s2 + $0x560] sm:$0xff]
  %v226 = vld [vmem:[%s2 + $0x568] sm:$0xff]
  %v227 = vld [vmem:[%s2 + $0x570] sm:$0xff]
  %v228 = vld [vmem:[%s2 + $0x578] sm:$0xff]
  %v229 = vld [vmem:[%s2 + $0x580] sm:$0xff]
  %v230 = vld [vmem:[%s2 + $0x588] sm:$0xff]
  %v231 = vld [vmem:[%s2 + $0x590] sm:$0xff]
  %v232 = vld [vmem:[%s2 + $0x598] sm:$0xff]
  %v233 = vld [vmem:[%s2 + $0x5a0] sm:$0xff]
  %v234 = vld [vmem:[%s2 + $0x5a8] sm:$0xff]
  %v235 = vld [vmem:[%s2 + $0x5b0] sm:$0xff]
  %v236 = vld [vmem:[%s2 + $0x5b8] sm:$0xff]
  %v237 = vld [vmem:[%s2 + $0x5c0] sm:$0xff]
  %v238 = vld [vmem:[%s2 + $0x5c8] sm:$0xff]
  %v239 = vld [vmem:[%s2 + $0x5d0] sm:$0xff]
  %v240 = vld [vmem:[%s2 + $0x5d8] sm:$0xff]
  %v241 = vld [vmem:[%s2 + $0x5e0] sm:$0xff]
  %v242 = vld [vmem:[%s2 + $0x5e8] sm:$0xff]
  %v243 = vld [vmem:[%s2 + $0x5f0] sm:$0xff]
  %v244 = vld [vmem:[%s2 + $0x5f8] sm:$0xff]
  %v245 = vld [vmem:[%s2 + $0x600] sm:$0xff]
  %v246 = vld [vmem:[%s2 + $0x608] sm:$0xff]
  %v247 = vld [vmem:[%s2 + $0x610] sm:$0xff]
  %v248 = vld [vmem:[%s2 + $0x618] sm:$0xff]
  %v249 = vld [vmem:[%s2 + $0x620] sm:$0xff]
  %v250 = vld [vmem:[%s2 + $0x628] sm:$0xff]
  %v251 = vld [vmem:[%s2 + $0x630] sm:$0xff]
  %v252 = vld [vmem:[%s2 + $0x638] sm:$0xff]
  %v253 = vld [vmem:[%s2 + $0x640] sm:$0xff]
  %v254 = vld [vmem:[%s2 + $0x648] sm:$0xff]
  %v255 = vld [vmem:[%s2 + $0x650] sm:$0xff]
  %v256 = vld [vmem:[%s2 + $0x658] sm:$0xff]
  %v257 = vld [vmem:[%s2 + $0x660] sm:$0xff]
  %v258 = vld [vmem:[%s2 + $0x668] sm:$0xff]
  %v259 = vld [vmem:[%s2 + $0x670] sm:$0xff]
  %v260 = vld [vmem:[%s2 + $0x678] sm:$0xff]
  %v261 = vld [vmem:[%s2 + $0x680] sm:$0xff]
  %v262 = vld [vmem:[%s2 + $0x688] sm:$0xff]
  %v263 = vld [vmem:[%s2 + $0x690] sm:$0xff]
  %v264 = vld [vmem:[%s2 + $0x698] sm:$0xff]
  %v265 = vld [vmem:[%s2 + $0x6a0] sm:$0xff]
  %v266 = vld [vmem:[%s2 + $0x6a8] sm:$0xff]
  %v267 = vld [vmem:[%s2 + $0x6b0] sm:$0xff]
  %v268 = vld [vmem:[%s2 + $0x6b8] sm:$0xff]
  %v269 = vld [vmem:[%s2 + $0x6c0] sm:$0xff]
  %v270 = vld [vmem:[%s2 + $0x6c8] sm:$0xff]
  %v271 = vld [vmem:[%s2 + $0x6d0] sm:$0xff]
  %v272 = vld [vmem:[%s2 + $0x6d8] sm:$0xff]
  %v273 = vld [vmem:[%s2 + $0x6e0] sm:$0xff]
  %v274 = vld [vmem:[%s2 + $0x6e8] sm:$0xff]
  %v275 = vld [vmem:[%s2 + $0x6f0] sm:$0xff]
  %v276 = vld [vmem:[%s2 + $0x6f8] sm:$0xff]
  %v277 = vld [vmem:[%s2 + $0x700] sm:$0xff]
  %v278 = vld [vmem:[%s2 + $0x708] sm:$0xff]
  %v279 = vld [vmem:[%s2 + $0x710] sm:$0xff]
  %v280 = vld [vmem:[%s2 + $0x718] sm:$0xff]
  %v281 = vld [vmem:[%s2 + $0x720] sm:$0xff]
  %v282 = vld [vmem:[%s2 + $0x728] sm:$0xff]
  %v283 = vld [vmem:[%s2 + $0x730] sm:$0xff]
  %v284 = vld [vmem:[%s2 + $0x738] sm:$0xff]
  %v285 = vld [vmem:[%s2 + $0x740] sm:$0xff]
  %v286 = vld [vmem:[%s2 + $0x748] sm:$0xff]
  %v287 = vld [vmem:[%s2 + $0x750] sm:$0xff]
  %v288 = vld [vmem:[%s2 + $0x758] sm:$0xff]
  %v289 = vld [vmem:[%s2 + $0x760] sm:$0xff]
  %v290 = vld [vmem:[%s2 + $0x768] sm:$0xff]
  %v291 = vld [vmem:[%s2 + $0x770] sm:$0xff]
  %v292 = vld [vmem:[%s2 + $0x778] sm:$0xff]
  %v293 = vld [vmem:[%s2 + $0x780] sm:$0xff]
  %v294 = vld [vmem:[%s2 + $0x788] sm:$0xff]
  %v295 = vld [vmem:[%s2 + $0x790] sm:$0xff]
  %v296 = vld [vmem:[%s2 + $0x798] sm:$0xff]
  %v297 = vld [vmem:[%s2 + $0x7a0] sm:$0xff]
  %v298 = vld [vmem:[%s2 + $0x7a8] sm:$0xff]
  %v299 = vld [vmem:[%s2 + $0x7b0] sm:$0xff]
  %v300 = vld [vmem:[%s2 + $0x7b8] sm:$0xff]
  %v301 = vld [vmem:[%s2 + $0x7c0] sm:$0xff]
  %v302 = vld [vmem:[%s2 + $0x7c8] sm:$0xff]
  %v303 = vld [vmem:[%s2 + $0x7d0] sm:$0xff]
  %v304 = vld [vmem:[%s2 + $0x7d8] sm:$0xff]
  %v305 = vld [vmem:[%s2 + $0x7e0] sm:$0xff]
  %v306 = vld [vmem:[%s2 + $0x7e8] sm:$0xff]
  %v307 = vld [vmem:[%s2 + $0x7f0] sm:$0xff]
  %v308 = vld [vmem:[%s2 + $0x7f8] sm:$0xff]
  %v309 = vld [vmem:[%s3] sm:$0xff]
  %v310 = vld [vmem:[%s3 + $0x8] sm:$0xff]
  %v311 = vld [vmem:[%s3 + $0x10] sm:$0xff]
  %v312 = vld [vmem:[%s3 + $0x18] sm:$0xff]
  %v313 = vld [vmem:[%s3 + $0x20] sm:$0xff]
  %v314 = vld [vmem:[%s3 + $0x28] sm:$0xff]
  %v315 = vld [vmem:[%s3 + $0x30] sm:$0xff]
  %v316 = vld [vmem:[%s3 + $0x38] sm:$0xff]
  %v325 = vunpack.c.l.b16 %v309
  %v326 = vunpack.c.h.b16 %v309
  %v327 = vunpack.c.l.b16 %v310
  %v328 = vunpack.c.h.b16 %v310
  %v329 = vunpack.c.l.b16 %v311
  %v330 = vunpack.c.h.b16 %v311
  %v331 = vunpack.c.l.b16 %v312
  %v332 = vunpack.c.h.b16 %v312
  %v333 = vunpack.c.l.b16 %v313
  %v334 = vunpack.c.h.b16 %v313
  %v335 = vunpack.c.l.b16 %v314
  %v336 = vunpack.c.h.b16 %v314
  %v337 = vunpack.c.l.b16 %v315
  %v338 = vunpack.c.h.b16 %v315
  %v339 = vunpack.c.l.b16 %v316
  %v340 = vunpack.c.h.b16 %v316
  %v341 = vpack.c.b16 %v329, %v325
  %v342 = vpack.c.b16 %v330, %v326
  %v343 = vpack.c.b16 %v331, %v327
  %v344 = vpack.c.b16 %v332, %v328
  %v345 = vpack.c.b16 %v337, %v333
  %v346 = vpack.c.b16 %v338, %v334
  %v347 = vpack.c.b16 %v339, %v335
  %v348 = vpack.c.b16 %v340, %v336
  %vm357 = vcmask 261120
  %v359 = vsel %vm357, %v52, 0
  %361 = vmatpush.bf16.msra.mxu0 0
  %362 = vmatpush.bf16.msra.mxu0 0
  %363 = vmatpush.bf16.msra.mxu0 0
  %364 = vmatpush.bf16.msra.mxu0 0
  %365 = vmatpush.bf16.msra.mxu0 0
  %366 = vmatpush.bf16.msra.mxu0 0
  %367 = vmatpush.bf16.msra.mxu0 %v345
  %368 = vmatpush.bf16.msra.mxu0 %v341
  %369 = vmatmul.bf16.gmra.mxu0 %v359
  %v370 = vpop.f32.mrf.mxu0
  %v371 = vadd.f32 0.0, %v370
  %v372 = vpop.f32.mrf.mxu0
  %373 = vdwg.mxu0
  %374 = vmatpush.bf16.msra.mxu0 0
  %375 = vmatpush.bf16.msra.mxu0 0
  %376 = vmatpush.bf16.msra.mxu0 0
  %377 = vmatpush.bf16.msra.mxu0 0
  %378 = vmatpush.bf16.msra.mxu0 0
  %379 = vmatpush.bf16.msra.mxu0 0
  %380 = vmatpush.bf16.msra.mxu0 %v346
  %381 = vmatpush.bf16.msra.mxu0 %v342
  %382 = vmatmul.bf16.gmra.mxu0 %v359
  %v383 = vpop.f32.mrf.mxu0
  %v384 = vadd.f32 0.0, %v383
  %v385 = vpop.f32.mrf.mxu0
  %386 = vdwg.mxu0
  %387 = vmatpush.bf16.msra.mxu0 0
  %388 = vmatpush.bf16.msra.mxu0 0
  %389 = vmatpush.bf16.msra.mxu0 0
  %390 = vmatpush.bf16.msra.mxu0 0
  %391 = vmatpush.bf16.msra.mxu0 0
  %392 = vmatpush.bf16.msra.mxu0 0
  %393 = vmatpush.bf16.msra.mxu0 %v347
  %394 = vmatpush.bf16.msra.mxu0 %v343
  %395 = vmatmul.bf16.gmra.mxu0 %v359
  %v396 = vpop.f32.mrf.mxu0
  %v397 = vadd.f32 0.0, %v396
  %v398 = vpop.f32.mrf.mxu0
  %399 = vdwg.mxu0
  %400 = vmatpush.bf16.msra.mxu0 0
  %401 = vmatpush.bf16.msra.mxu0 0
  %402 = vmatpush.bf16.msra.mxu0 0
  %403 = vmatpush.bf16.msra.mxu0 0
  %404 = vmatpush.bf16.msra.mxu0 0
  %405 = vmatpush.bf16.msra.mxu0 0
  %406 = vmatpush.bf16.msra.mxu0 %v348
  %407 = vmatpush.bf16.msra.mxu0 %v344
  %408 = vmatmul.bf16.gmra.mxu0 %v359
  %v409 = vpop.f32.mrf.mxu0
  %v410 = vadd.f32 0.0, %v409
  %v411 = vpop.f32.mrf.mxu0
  %412 = vdwg.mxu0
  %v669 = vunpack.c.l.b16 %v53
  %v670 = vunpack.c.h.b16 %v53
  %v671 = vunpack.c.l.b16 %v54
  %v672 = vunpack.c.h.b16 %v54
  %v673 = vunpack.c.l.b16 %v55
  %v674 = vunpack.c.h.b16 %v55
  %v675 = vunpack.c.l.b16 %v56
  %v676 = vunpack.c.h.b16 %v56
  %v677 = vunpack.c.l.b16 %v57
  %v678 = vunpack.c.h.b16 %v57
  %v679 = vunpack.c.l.b16 %v58
  %v680 = vunpack.c.h.b16 %v58
  %v681 = vunpack.c.l.b16 %v59
  %v682 = vunpack.c.h.b16 %v59
  %v683 = vunpack.c.l.b16 %v60
  %v684 = vunpack.c.h.b16 %v60
  %v685 = vunpack.c.l.b16 %v61
  %v686 = vunpack.c.h.b16 %v61
  %v687 = vunpack.c.l.b16 %v62
  %v688 = vunpack.c.h.b16 %v62
  %v689 = vunpack.c.l.b16 %v63
  %v690 = vunpack.c.h.b16 %v63
  %v691 = vunpack.c.l.b16 %v64
  %v692 = vunpack.c.h.b16 %v64
  %v693 = vunpack.c.l.b16 %v65
  %v694 = vunpack.c.h.b16 %v65
  %v695 = vunpack.c.l.b16 %v66
  %v696 = vunpack.c.h.b16 %v66
  %v697 = vunpack.c.l.b16 %v67
  %v698 = vunpack.c.h.b16 %v67
  %v699 = vunpack.c.l.b16 %v68
  %v700 = vunpack.c.h.b16 %v68
  %v701 = vunpack.c.l.b16 %v69
  %v702 = vunpack.c.h.b16 %v69
  %v703 = vunpack.c.l.b16 %v70
  %v704 = vunpack.c.h.b16 %v70
  %v705 = vunpack.c.l.b16 %v71
  %v706 = vunpack.c.h.b16 %v71
  %v707 = vunpack.c.l.b16 %v72
  %v708 = vunpack.c.h.b16 %v72
  %v709 = vunpack.c.l.b16 %v73
  %v710 = vunpack.c.h.b16 %v73
  %v711 = vunpack.c.l.b16 %v74
  %v712 = vunpack.c.h.b16 %v74
  %v713 = vunpack.c.l.b16 %v75
  %v714 = vunpack.c.h.b16 %v75
  %v715 = vunpack.c.l.b16 %v76
  %v716 = vunpack.c.h.b16 %v76
  %v717 = vunpack.c.l.b16 %v77
  %v718 = vunpack.c.h.b16 %v77
  %v719 = vunpack.c.l.b16 %v78
  %v720 = vunpack.c.h.b16 %v78
  %v721 = vunpack.c.l.b16 %v79
  %v722 = vunpack.c.h.b16 %v79
  %v723 = vunpack.c.l.b16 %v80
  %v724 = vunpack.c.h.b16 %v80
  %v725 = vunpack.c.l.b16 %v81
  %v726 = vunpack.c.h.b16 %v81
  %v727 = vunpack.c.l.b16 %v82
  %v728 = vunpack.c.h.b16 %v82
  %v729 = vunpack.c.l.b16 %v83
  %v730 = vunpack.c.h.b16 %v83
  %v731 = vunpack.c.l.b16 %v84
  %v732 = vunpack.c.h.b16 %v84
  %v733 = vunpack.c.l.b16 %v85
  %v734 = vunpack.c.h.b16 %v85
  %v735 = vunpack.c.l.b16 %v86
  %v736 = vunpack.c.h.b16 %v86
  %v737 = vunpack.c.l.b16 %v87
  %v738 = vunpack.c.h.b16 %v87
  %v739 = vunpack.c.l.b16 %v88
  %v740 = vunpack.c.h.b16 %v88
  %v741 = vunpack.c.l.b16 %v89
  %v742 = vunpack.c.h.b16 %v89
  %v743 = vunpack.c.l.b16 %v90
  %v744 = vunpack.c.h.b16 %v90
  %v745 = vunpack.c.l.b16 %v91
  %v746 = vunpack.c.h.b16 %v91
  %v747 = vunpack.c.l.b16 %v92
  %v748 = vunpack.c.h.b16 %v92
  %v749 = vunpack.c.l.b16 %v93
  %v750 = vunpack.c.h.b16 %v93
  %v751 = vunpack.c.l.b16 %v94
  %v752 = vunpack.c.h.b16 %v94
  %v753 = vunpack.c.l.b16 %v95
  %v754 = vunpack.c.h.b16 %v95
  %v755 = vunpack.c.l.b16 %v96
  %v756 = vunpack.c.h.b16 %v96
  %v757 = vunpack.c.l.b16 %v97
  %v758 = vunpack.c.h.b16 %v97
  %v759 = vunpack.c.l.b16 %v98
  %v760 = vunpack.c.h.b16 %v98
  %v761 = vunpack.c.l.b16 %v99
  %v762 = vunpack.c.h.b16 %v99
  %v763 = vunpack.c.l.b16 %v100
  %v764 = vunpack.c.h.b16 %v100
  %v765 = vunpack.c.l.b16 %v101
  %v766 = vunpack.c.h.b16 %v101
  %v767 = vunpack.c.l.b16 %v102
  %v768 = vunpack.c.h.b16 %v102
  %v769 = vunpack.c.l.b16 %v103
  %v770 = vunpack.c.h.b16 %v103
  %v771 = vunpack.c.l.b16 %v104
  %v772 = vunpack.c.h.b16 %v104
  %v773 = vunpack.c.l.b16 %v105
  %v774 = vunpack.c.h.b16 %v105
  %v775 = vunpack.c.l.b16 %v106
  %v776 = vunpack.c.h.b16 %v106
  %v777 = vunpack.c.l.b16 %v107
  %v778 = vunpack.c.h.b16 %v107
  %v779 = vunpack.c.l.b16 %v108
  %v780 = vunpack.c.h.b16 %v108
  %v781 = vunpack.c.l.b16 %v109
  %v782 = vunpack.c.h.b16 %v109
  %v783 = vunpack.c.l.b16 %v110
  %v784 = vunpack.c.h.b16 %v110
  %v785 = vunpack.c.l.b16 %v111
  %v786 = vunpack.c.h.b16 %v111
  %v787 = vunpack.c.l.b16 %v112
  %v788 = vunpack.c.h.b16 %v112
  %v789 = vunpack.c.l.b16 %v113
  %v790 = vunpack.c.h.b16 %v113
  %v791 = vunpack.c.l.b16 %v114
  %v792 = vunpack.c.h.b16 %v114
  %v793 = vunpack.c.l.b16 %v115
  %v794 = vunpack.c.h.b16 %v115
  %v795 = vunpack.c.l.b16 %v116
  %v796 = vunpack.c.h.b16 %v116
  %v797 = vunpack.c.l.b16 %v117
  %v798 = vunpack.c.h.b16 %v117
  %v799 = vunpack.c.l.b16 %v118
  %v800 = vunpack.c.h.b16 %v118
  %v801 = vunpack.c.l.b16 %v119
  %v802 = vunpack.c.h.b16 %v119
  %v803 = vunpack.c.l.b16 %v120
  %v804 = vunpack.c.h.b16 %v120
  %v805 = vunpack.c.l.b16 %v121
  %v806 = vunpack.c.h.b16 %v121
  %v807 = vunpack.c.l.b16 %v122
  %v808 = vunpack.c.h.b16 %v122
  %v809 = vunpack.c.l.b16 %v123
  %v810 = vunpack.c.h.b16 %v123
  %v811 = vunpack.c.l.b16 %v124
  %v812 = vunpack.c.h.b16 %v124
  %v813 = vunpack.c.l.b16 %v125
  %v814 = vunpack.c.h.b16 %v125
  %v815 = vunpack.c.l.b16 %v126
  %v816 = vunpack.c.h.b16 %v126
  %v817 = vunpack.c.l.b16 %v127
  %v818 = vunpack.c.h.b16 %v127
  %v819 = vunpack.c.l.b16 %v128
  %v820 = vunpack.c.h.b16 %v128
  %v821 = vunpack.c.l.b16 %v129
  %v822 = vunpack.c.h.b16 %v129
  %v823 = vunpack.c.l.b16 %v130
  %v824 = vunpack.c.h.b16 %v130
  %v825 = vunpack.c.l.b16 %v131
  %v826 = vunpack.c.h.b16 %v131
  %v827 = vunpack.c.l.b16 %v132
  %v828 = vunpack.c.h.b16 %v132
  %v829 = vunpack.c.l.b16 %v133
  %v830 = vunpack.c.h.b16 %v133
  %v831 = vunpack.c.l.b16 %v134
  %v832 = vunpack.c.h.b16 %v134
  %v833 = vunpack.c.l.b16 %v135
  %v834 = vunpack.c.h.b16 %v135
  %v835 = vunpack.c.l.b16 %v136
  %v836 = vunpack.c.h.b16 %v136
  %v837 = vunpack.c.l.b16 %v137
  %v838 = vunpack.c.h.b16 %v137
  %v839 = vunpack.c.l.b16 %v138
  %v840 = vunpack.c.h.b16 %v138
  %v841 = vunpack.c.l.b16 %v139
  %v842 = vunpack.c.h.b16 %v139
  %v843 = vunpack.c.l.b16 %v140
  %v844 = vunpack.c.h.b16 %v140
  %v845 = vunpack.c.l.b16 %v141
  %v846 = vunpack.c.h.b16 %v141
  %v847 = vunpack.c.l.b16 %v142
  %v848 = vunpack.c.h.b16 %v142
  %v849 = vunpack.c.l.b16 %v143
  %v850 = vunpack.c.h.b16 %v143
  %v851 = vunpack.c.l.b16 %v144
  %v852 = vunpack.c.h.b16 %v144
  %v853 = vunpack.c.l.b16 %v145
  %v854 = vunpack.c.h.b16 %v145
  %v855 = vunpack.c.l.b16 %v146
  %v856 = vunpack.c.h.b16 %v146
  %v857 = vunpack.c.l.b16 %v147
  %v858 = vunpack.c.h.b16 %v147
  %v859 = vunpack.c.l.b16 %v148
  %v860 = vunpack.c.h.b16 %v148
  %v861 = vunpack.c.l.b16 %v149
  %v862 = vunpack.c.h.b16 %v149
  %v863 = vunpack.c.l.b16 %v150
  %v864 = vunpack.c.h.b16 %v150
  %v865 = vunpack.c.l.b16 %v151
  %v866 = vunpack.c.h.b16 %v151
  %v867 = vunpack.c.l.b16 %v152
  %v868 = vunpack.c.h.b16 %v152
  %v869 = vunpack.c.l.b16 %v153
  %v870 = vunpack.c.h.b16 %v153
  %v871 = vunpack.c.l.b16 %v154
  %v872 = vunpack.c.h.b16 %v154
  %v873 = vunpack.c.l.b16 %v155
  %v874 = vunpack.c.h.b16 %v155
  %v875 = vunpack.c.l.b16 %v156
  %v876 = vunpack.c.h.b16 %v156
  %v877 = vunpack.c.l.b16 %v157
  %v878 = vunpack.c.h.b16 %v157
  %v879 = vunpack.c.l.b16 %v158
  %v880 = vunpack.c.h.b16 %v158
  %v881 = vunpack.c.l.b16 %v159
  %v882 = vunpack.c.h.b16 %v159
  %v883 = vunpack.c.l.b16 %v160
  %v884 = vunpack.c.h.b16 %v160
  %v885 = vunpack.c.l.b16 %v161
  %v886 = vunpack.c.h.b16 %v161
  %v887 = vunpack.c.l.b16 %v162
  %v888 = vunpack.c.h.b16 %v162
  %v889 = vunpack.c.l.b16 %v163
  %v890 = vunpack.c.h.b16 %v163
  %v891 = vunpack.c.l.b16 %v164
  %v892 = vunpack.c.h.b16 %v164
  %v893 = vunpack.c.l.b16 %v165
  %v894 = vunpack.c.h.b16 %v165
  %v895 = vunpack.c.l.b16 %v166
  %v896 = vunpack.c.h.b16 %v166
  %v897 = vunpack.c.l.b16 %v167
  %v898 = vunpack.c.h.b16 %v167
  %v899 = vunpack.c.l.b16 %v168
  %v900 = vunpack.c.h.b16 %v168
  %v901 = vunpack.c.l.b16 %v169
  %v902 = vunpack.c.h.b16 %v169
  %v903 = vunpack.c.l.b16 %v170
  %v904 = vunpack.c.h.b16 %v170
  %v905 = vunpack.c.l.b16 %v171
  %v906 = vunpack.c.h.b16 %v171
  %v907 = vunpack.c.l.b16 %v172
  %v908 = vunpack.c.h.b16 %v172
  %v909 = vunpack.c.l.b16 %v173
  %v910 = vunpack.c.h.b16 %v173
  %v911 = vunpack.c.l.b16 %v174
  %v912 = vunpack.c.h.b16 %v174
  %v913 = vunpack.c.l.b16 %v175
  %v914 = vunpack.c.h.b16 %v175
  %v915 = vunpack.c.l.b16 %v176
  %v916 = vunpack.c.h.b16 %v176
  %v917 = vunpack.c.l.b16 %v177
  %v918 = vunpack.c.h.b16 %v177
  %v919 = vunpack.c.l.b16 %v178
  %v920 = vunpack.c.h.b16 %v178
  %v921 = vunpack.c.l.b16 %v179
  %v922 = vunpack.c.h.b16 %v179
  %v923 = vunpack.c.l.b16 %v180
  %v924 = vunpack.c.h.b16 %v180
  %v925 = vunpack.c.l.b16 %v181
  %v926 = vunpack.c.h.b16 %v181
  %v927 = vunpack.c.l.b16 %v182
  %v928 = vunpack.c.h.b16 %v182
  %v929 = vunpack.c.l.b16 %v183
  %v930 = vunpack.c.h.b16 %v183
  %v931 = vunpack.c.l.b16 %v184
  %v932 = vunpack.c.h.b16 %v184
  %v933 = vunpack.c.l.b16 %v185
  %v934 = vunpack.c.h.b16 %v185
  %v935 = vunpack.c.l.b16 %v186
  %v936 = vunpack.c.h.b16 %v186
  %v937 = vunpack.c.l.b16 %v187
  %v938 = vunpack.c.h.b16 %v187
  %v939 = vunpack.c.l.b16 %v188
  %v940 = vunpack.c.h.b16 %v188
  %v941 = vunpack.c.l.b16 %v189
  %v942 = vunpack.c.h.b16 %v189
  %v943 = vunpack.c.l.b16 %v190
  %v944 = vunpack.c.h.b16 %v190
  %v945 = vunpack.c.l.b16 %v191
  %v946 = vunpack.c.h.b16 %v191
  %v947 = vunpack.c.l.b16 %v192
  %v948 = vunpack.c.h.b16 %v192
  %v949 = vunpack.c.l.b16 %v193
  %v950 = vunpack.c.h.b16 %v193
  %v951 = vunpack.c.l.b16 %v194
  %v952 = vunpack.c.h.b16 %v194
  %v953 = vunpack.c.l.b16 %v195
  %v954 = vunpack.c.h.b16 %v195
  %v955 = vunpack.c.l.b16 %v196
  %v956 = vunpack.c.h.b16 %v196
  %v957 = vunpack.c.l.b16 %v197
  %v958 = vunpack.c.h.b16 %v197
  %v959 = vunpack.c.l.b16 %v198
  %v960 = vunpack.c.h.b16 %v198
  %v961 = vunpack.c.l.b16 %v199
  %v962 = vunpack.c.h.b16 %v199
  %v963 = vunpack.c.l.b16 %v200
  %v964 = vunpack.c.h.b16 %v200
  %v965 = vunpack.c.l.b16 %v201
  %v966 = vunpack.c.h.b16 %v201
  %v967 = vunpack.c.l.b16 %v202
  %v968 = vunpack.c.h.b16 %v202
  %v969 = vunpack.c.l.b16 %v203
  %v970 = vunpack.c.h.b16 %v203
  %v971 = vunpack.c.l.b16 %v204
  %v972 = vunpack.c.h.b16 %v204
  %v973 = vunpack.c.l.b16 %v205
  %v974 = vunpack.c.h.b16 %v205
  %v975 = vunpack.c.l.b16 %v206
  %v976 = vunpack.c.h.b16 %v206
  %v977 = vunpack.c.l.b16 %v207
  %v978 = vunpack.c.h.b16 %v207
  %v979 = vunpack.c.l.b16 %v208
  %v980 = vunpack.c.h.b16 %v208
  %v981 = vunpack.c.l.b16 %v209
  %v982 = vunpack.c.h.b16 %v209
  %v983 = vunpack.c.l.b16 %v210
  %v984 = vunpack.c.h.b16 %v210
  %v985 = vunpack.c.l.b16 %v211
  %v986 = vunpack.c.h.b16 %v211
  %v987 = vunpack.c.l.b16 %v212
  %v988 = vunpack.c.h.b16 %v212
  %v989 = vunpack.c.l.b16 %v213
  %v990 = vunpack.c.h.b16 %v213
  %v991 = vunpack.c.l.b16 %v214
  %v992 = vunpack.c.h.b16 %v214
  %v993 = vunpack.c.l.b16 %v215
  %v994 = vunpack.c.h.b16 %v215
  %v995 = vunpack.c.l.b16 %v216
  %v996 = vunpack.c.h.b16 %v216
  %v997 = vunpack.c.l.b16 %v217
  %v998 = vunpack.c.h.b16 %v217
  %v999 = vunpack.c.l.b16 %v218
  %v1000 = vunpack.c.h.b16 %v218
  %v1001 = vunpack.c.l.b16 %v219
  %v1002 = vunpack.c.h.b16 %v219
  %v1003 = vunpack.c.l.b16 %v220
  %v1004 = vunpack.c.h.b16 %v220
  %v1005 = vunpack.c.l.b16 %v221
  %v1006 = vunpack.c.h.b16 %v221
  %v1007 = vunpack.c.l.b16 %v222
  %v1008 = vunpack.c.h.b16 %v222
  %v1009 = vunpack.c.l.b16 %v223
  %v1010 = vunpack.c.h.b16 %v223
  %v1011 = vunpack.c.l.b16 %v224
  %v1012 = vunpack.c.h.b16 %v224
  %v1013 = vunpack.c.l.b16 %v225
  %v1014 = vunpack.c.h.b16 %v225
  %v1015 = vunpack.c.l.b16 %v226
  %v1016 = vunpack.c.h.b16 %v226
  %v1017 = vunpack.c.l.b16 %v227
  %v1018 = vunpack.c.h.b16 %v227
  %v1019 = vunpack.c.l.b16 %v228
  %v1020 = vunpack.c.h.b16 %v228
  %v1021 = vunpack.c.l.b16 %v229
  %v1022 = vunpack.c.h.b16 %v229
  %v1023 = vunpack.c.l.b16 %v230
  %v1024 = vunpack.c.h.b16 %v230
  %v1025 = vunpack.c.l.b16 %v231
  %v1026 = vunpack.c.h.b16 %v231
  %v1027 = vunpack.c.l.b16 %v232
  %v1028 = vunpack.c.h.b16 %v232
  %v1029 = vunpack.c.l.b16 %v233
  %v1030 = vunpack.c.h.b16 %v233
  %v1031 = vunpack.c.l.b16 %v234
  %v1032 = vunpack.c.h.b16 %v234
  %v1033 = vunpack.c.l.b16 %v235
  %v1034 = vunpack.c.h.b16 %v235
  %v1035 = vunpack.c.l.b16 %v236
  %v1036 = vunpack.c.h.b16 %v236
  %v1037 = vunpack.c.l.b16 %v237
  %v1038 = vunpack.c.h.b16 %v237
  %v1039 = vunpack.c.l.b16 %v238
  %v1040 = vunpack.c.h.b16 %v238
  %v1041 = vunpack.c.l.b16 %v239
  %v1042 = vunpack.c.h.b16 %v239
  %v1043 = vunpack.c.l.b16 %v240
  %v1044 = vunpack.c.h.b16 %v240
  %v1045 = vunpack.c.l.b16 %v241
  %v1046 = vunpack.c.h.b16 %v241
  %v1047 = vunpack.c.l.b16 %v242
  %v1048 = vunpack.c.h.b16 %v242
  %v1049 = vunpack.c.l.b16 %v243
  %v1050 = vunpack.c.h.b16 %v243
  %v1051 = vunpack.c.l.b16 %v244
  %v1052 = vunpack.c.h.b16 %v244
  %v1053 = vunpack.c.l.b16 %v245
  %v1054 = vunpack.c.h.b16 %v245
  %v1055 = vunpack.c.l.b16 %v246
  %v1056 = vunpack.c.h.b16 %v246
  %v1057 = vunpack.c.l.b16 %v247
  %v1058 = vunpack.c.h.b16 %v247
  %v1059 = vunpack.c.l.b16 %v248
  %v1060 = vunpack.c.h.b16 %v248
  %v1061 = vunpack.c.l.b16 %v249
  %v1062 = vunpack.c.h.b16 %v249
  %v1063 = vunpack.c.l.b16 %v250
  %v1064 = vunpack.c.h.b16 %v250
  %v1065 = vunpack.c.l.b16 %v251
  %v1066 = vunpack.c.h.b16 %v251
  %v1067 = vunpack.c.l.b16 %v252
  %v1068 = vunpack.c.h.b16 %v252
  %v1069 = vunpack.c.l.b16 %v253
  %v1070 = vunpack.c.h.b16 %v253
  %v1071 = vunpack.c.l.b16 %v254
  %v1072 = vunpack.c.h.b16 %v254
  %v1073 = vunpack.c.l.b16 %v255
  %v1074 = vunpack.c.h.b16 %v255
  %v1075 = vunpack.c.l.b16 %v256
  %v1076 = vunpack.c.h.b16 %v256
  %v1077 = vunpack.c.l.b16 %v257
  %v1078 = vunpack.c.h.b16 %v257
  %v1079 = vunpack.c.l.b16 %v258
  %v1080 = vunpack.c.h.b16 %v258
  %v1081 = vunpack.c.l.b16 %v259
  %v1082 = vunpack.c.h.b16 %v259
  %v1083 = vunpack.c.l.b16 %v260
  %v1084 = vunpack.c.h.b16 %v260
  %v1085 = vunpack.c.l.b16 %v261
  %v1086 = vunpack.c.h.b16 %v261
  %v1087 = vunpack.c.l.b16 %v262
  %v1088 = vunpack.c.h.b16 %v262
  %v1089 = vunpack.c.l.b16 %v263
  %v1090 = vunpack.c.h.b16 %v263
  %v1091 = vunpack.c.l.b16 %v264
  %v1092 = vunpack.c.h.b16 %v264
  %v1093 = vunpack.c.l.b16 %v265
  %v1094 = vunpack.c.h.b16 %v265
  %v1095 = vunpack.c.l.b16 %v266
  %v1096 = vunpack.c.h.b16 %v266
  %v1097 = vunpack.c.l.b16 %v267
  %v1098 = vunpack.c.h.b16 %v267
  %v1099 = vunpack.c.l.b16 %v268
  %v1100 = vunpack.c.h.b16 %v268
  %v1101 = vunpack.c.l.b16 %v269
  %v1102 = vunpack.c.h.b16 %v269
  %v1103 = vunpack.c.l.b16 %v270
  %v1104 = vunpack.c.h.b16 %v270
  %v1105 = vunpack.c.l.b16 %v271
  %v1106 = vunpack.c.h.b16 %v271
  %v1107 = vunpack.c.l.b16 %v272
  %v1108 = vunpack.c.h.b16 %v272
  %v1109 = vunpack.c.l.b16 %v273
  %v1110 = vunpack.c.h.b16 %v273
  %v1111 = vunpack.c.l.b16 %v274
  %v1112 = vunpack.c.h.b16 %v274
  %v1113 = vunpack.c.l.b16 %v275
  %v1114 = vunpack.c.h.b16 %v275
  %v1115 = vunpack.c.l.b16 %v276
  %v1116 = vunpack.c.h.b16 %v276
  %v1117 = vunpack.c.l.b16 %v277
  %v1118 = vunpack.c.h.b16 %v277
  %v1119 = vunpack.c.l.b16 %v278
  %v1120 = vunpack.c.h.b16 %v278
  %v1121 = vunpack.c.l.b16 %v279
  %v1122 = vunpack.c.h.b16 %v279
  %v1123 = vunpack.c.l.b16 %v280
  %v1124 = vunpack.c.h.b16 %v280
  %v1125 = vunpack.c.l.b16 %v281
  %v1126 = vunpack.c.h.b16 %v281
  %v1127 = vunpack.c.l.b16 %v282
  %v1128 = vunpack.c.h.b16 %v282
  %v1129 = vunpack.c.l.b16 %v283
  %v1130 = vunpack.c.h.b16 %v283
  %v1131 = vunpack.c.l.b16 %v284
  %v1132 = vunpack.c.h.b16 %v284
  %v1133 = vunpack.c.l.b16 %v285
  %v1134 = vunpack.c.h.b16 %v285
  %v1135 = vunpack.c.l.b16 %v286
  %v1136 = vunpack.c.h.b16 %v286
  %v1137 = vunpack.c.l.b16 %v287
  %v1138 = vunpack.c.h.b16 %v287
  %v1139 = vunpack.c.l.b16 %v288
  %v1140 = vunpack.c.h.b16 %v288
  %v1141 = vunpack.c.l.b16 %v289
  %v1142 = vunpack.c.h.b16 %v289
  %v1143 = vunpack.c.l.b16 %v290
  %v1144 = vunpack.c.h.b16 %v290
  %v1145 = vunpack.c.l.b16 %v291
  %v1146 = vunpack.c.h.b16 %v291
  %v1147 = vunpack.c.l.b16 %v292
  %v1148 = vunpack.c.h.b16 %v292
  %v1149 = vunpack.c.l.b16 %v293
  %v1150 = vunpack.c.h.b16 %v293
  %v1151 = vunpack.c.l.b16 %v294
  %v1152 = vunpack.c.h.b16 %v294
  %v1153 = vunpack.c.l.b16 %v295
  %v1154 = vunpack.c.h.b16 %v295
  %v1155 = vunpack.c.l.b16 %v296
  %v1156 = vunpack.c.h.b16 %v296
  %v1157 = vunpack.c.l.b16 %v297
  %v1158 = vunpack.c.h.b16 %v297
  %v1159 = vunpack.c.l.b16 %v298
  %v1160 = vunpack.c.h.b16 %v298
  %v1161 = vunpack.c.l.b16 %v299
  %v1162 = vunpack.c.h.b16 %v299
  %v1163 = vunpack.c.l.b16 %v300
  %v1164 = vunpack.c.h.b16 %v300
  %v1165 = vunpack.c.l.b16 %v301
  %v1166 = vunpack.c.h.b16 %v301
  %v1167 = vunpack.c.l.b16 %v302
  %v1168 = vunpack.c.h.b16 %v302
  %v1169 = vunpack.c.l.b16 %v303
  %v1170 = vunpack.c.h.b16 %v303
  %v1171 = vunpack.c.l.b16 %v304
  %v1172 = vunpack.c.h.b16 %v304
  %v1173 = vunpack.c.l.b16 %v305
  %v1174 = vunpack.c.h.b16 %v305
  %v1175 = vunpack.c.l.b16 %v306
  %v1176 = vunpack.c.h.b16 %v306
  %v1177 = vunpack.c.l.b16 %v307
  %v1178 = vunpack.c.h.b16 %v307
  %v1179 = vunpack.c.l.b16 %v308
  %v1180 = vunpack.c.h.b16 %v308
  %v1181 = vpack.c.b16 %v673, %v669
  %v1182 = vpack.c.b16 %v674, %v670
  %v1183 = vpack.c.b16 %v675, %v671
  %v1184 = vpack.c.b16 %v676, %v672
  %v1185 = vpack.c.b16 %v681, %v677
  %v1186 = vpack.c.b16 %v682, %v678
  %v1187 = vpack.c.b16 %v683, %v679
  %v1188 = vpack.c.b16 %v684, %v680
  %v1189 = vpack.c.b16 %v689, %v685
  %v1190 = vpack.c.b16 %v690, %v686
  %v1191 = vpack.c.b16 %v691, %v687
  %v1192 = vpack.c.b16 %v692, %v688
  %v1193 = vpack.c.b16 %v697, %v693
  %v1194 = vpack.c.b16 %v698, %v694
  %v1195 = vpack.c.b16 %v699, %v695
  %v1196 = vpack.c.b16 %v700, %v696
  %v1197 = vpack.c.b16 %v705, %v701
  %v1198 = vpack.c.b16 %v706, %v702
  %v1199 = vpack.c.b16 %v707, %v703
  %v1200 = vpack.c.b16 %v708, %v704
  %v1201 = vpack.c.b16 %v713, %v709
  %v1202 = vpack.c.b16 %v714, %v710
  %v1203 = vpack.c.b16 %v715, %v711
  %v1204 = vpack.c.b16 %v716, %v712
  %v1205 = vpack.c.b16 %v721, %v717
  %v1206 = vpack.c.b16 %v722, %v718
  %v1207 = vpack.c.b16 %v723, %v719
  %v1208 = vpack.c.b16 %v724, %v720
  %v1209 = vpack.c.b16 %v729, %v725
  %v1210 = vpack.c.b16 %v730, %v726
  %v1211 = vpack.c.b16 %v731, %v727
  %v1212 = vpack.c.b16 %v732, %v728
  %v1213 = vpack.c.b16 %v737, %v733
  %v1214 = vpack.c.b16 %v738, %v734
  %v1215 = vpack.c.b16 %v739, %v735
  %v1216 = vpack.c.b16 %v740, %v736
  %v1217 = vpack.c.b16 %v745, %v741
  %v1218 = vpack.c.b16 %v746, %v742
  %v1219 = vpack.c.b16 %v747, %v743
  %v1220 = vpack.c.b16 %v748, %v744
  %v1221 = vpack.c.b16 %v753, %v749
  %v1222 = vpack.c.b16 %v754, %v750
  %v1223 = vpack.c.b16 %v755, %v751
  %v1224 = vpack.c.b16 %v756, %v752
  %v1225 = vpack.c.b16 %v761, %v757
  %v1226 = vpack.c.b16 %v762, %v758
  %v1227 = vpack.c.b16 %v763, %v759
  %v1228 = vpack.c.b16 %v764, %v760
  %v1229 = vpack.c.b16 %v769, %v765
  %v1230 = vpack.c.b16 %v770, %v766
  %v1231 = vpack.c.b16 %v771, %v767
  %v1232 = vpack.c.b16 %v772, %v768
  %v1233 = vpack.c.b16 %v777, %v773
  %v1234 = vpack.c.b16 %v778, %v774
  %v1235 = vpack.c.b16 %v779, %v775
  %v1236 = vpack.c.b16 %v780, %v776
  %v1237 = vpack.c.b16 %v785, %v781
  %v1238 = vpack.c.b16 %v786, %v782
  %v1239 = vpack.c.b16 %v787, %v783
  %v1240 = vpack.c.b16 %v788, %v784
  %v1241 = vpack.c.b16 %v793, %v789
  %v1242 = vpack.c.b16 %v794, %v790
  %v1243 = vpack.c.b16 %v795, %v791
  %v1244 = vpack.c.b16 %v796, %v792
  %v1245 = vpack.c.b16 %v801, %v797
  %v1246 = vpack.c.b16 %v802, %v798
  %v1247 = vpack.c.b16 %v803, %v799
  %v1248 = vpack.c.b16 %v804, %v800
  %v1249 = vpack.c.b16 %v809, %v805
  %v1250 = vpack.c.b16 %v810, %v806
  %v1251 = vpack.c.b16 %v811, %v807
  %v1252 = vpack.c.b16 %v812, %v808
  %v1253 = vpack.c.b16 %v817, %v813
  %v1254 = vpack.c.b16 %v818, %v814
  %v1255 = vpack.c.b16 %v819, %v815
  %v1256 = vpack.c.b16 %v820, %v816
  %v1257 = vpack.c.b16 %v825, %v821
  %v1258 = vpack.c.b16 %v826, %v822
  %v1259 = vpack.c.b16 %v827, %v823
  %v1260 = vpack.c.b16 %v828, %v824
  %v1261 = vpack.c.b16 %v833, %v829
  %v1262 = vpack.c.b16 %v834, %v830
  %v1263 = vpack.c.b16 %v835, %v831
  %v1264 = vpack.c.b16 %v836, %v832
  %v1265 = vpack.c.b16 %v841, %v837
  %v1266 = vpack.c.b16 %v842, %v838
  %v1267 = vpack.c.b16 %v843, %v839
  %v1268 = vpack.c.b16 %v844, %v840
  %v1269 = vpack.c.b16 %v849, %v845
  %v1270 = vpack.c.b16 %v850, %v846
  %v1271 = vpack.c.b16 %v851, %v847
  %v1272 = vpack.c.b16 %v852, %v848
  %v1273 = vpack.c.b16 %v857, %v853
  %v1274 = vpack.c.b16 %v858, %v854
  %v1275 = vpack.c.b16 %v859, %v855
  %v1276 = vpack.c.b16 %v860, %v856
  %v1277 = vpack.c.b16 %v865, %v861
  %v1278 = vpack.c.b16 %v866, %v862
  %v1279 = vpack.c.b16 %v867, %v863
  %v1280 = vpack.c.b16 %v868, %v864
  %v1281 = vpack.c.b16 %v873, %v869
  %v1282 = vpack.c.b16 %v874, %v870
  %v1283 = vpack.c.b16 %v875, %v871
  %v1284 = vpack.c.b16 %v876, %v872
  %v1285 = vpack.c.b16 %v881, %v877
  %v1286 = vpack.c.b16 %v882, %v878
  %v1287 = vpack.c.b16 %v883, %v879
  %v1288 = vpack.c.b16 %v884, %v880
  %v1289 = vpack.c.b16 %v889, %v885
  %v1290 = vpack.c.b16 %v890, %v886
  %v1291 = vpack.c.b16 %v891, %v887
  %v1292 = vpack.c.b16 %v892, %v888
  %v1293 = vpack.c.b16 %v897, %v893
  %v1294 = vpack.c.b16 %v898, %v894
  %v1295 = vpack.c.b16 %v899, %v895
  %v1296 = vpack.c.b16 %v900, %v896
  %v1297 = vpack.c.b16 %v905, %v901
  %v1298 = vpack.c.b16 %v906, %v902
  %v1299 = vpack.c.b16 %v907, %v903
  %v1300 = vpack.c.b16 %v908, %v904
  %v1301 = vpack.c.b16 %v913, %v909
  %v1302 = vpack.c.b16 %v914, %v910
  %v1303 = vpack.c.b16 %v915, %v911
  %v1304 = vpack.c.b16 %v916, %v912
  %v1305 = vpack.c.b16 %v921, %v917
  %v1306 = vpack.c.b16 %v922, %v918
  %v1307 = vpack.c.b16 %v923, %v919
  %v1308 = vpack.c.b16 %v924, %v920
  %v1309 = vpack.c.b16 %v929, %v925
  %v1310 = vpack.c.b16 %v930, %v926
  %v1311 = vpack.c.b16 %v931, %v927
  %v1312 = vpack.c.b16 %v932, %v928
  %v1313 = vpack.c.b16 %v937, %v933
  %v1314 = vpack.c.b16 %v938, %v934
  %v1315 = vpack.c.b16 %v939, %v935
  %v1316 = vpack.c.b16 %v940, %v936
  %v1317 = vpack.c.b16 %v945, %v941
  %v1318 = vpack.c.b16 %v946, %v942
  %v1319 = vpack.c.b16 %v947, %v943
  %v1320 = vpack.c.b16 %v948, %v944
  %v1321 = vpack.c.b16 %v953, %v949
  %v1322 = vpack.c.b16 %v954, %v950
  %v1323 = vpack.c.b16 %v955, %v951
  %v1324 = vpack.c.b16 %v956, %v952
  %v1325 = vpack.c.b16 %v961, %v957
  %v1326 = vpack.c.b16 %v962, %v958
  %v1327 = vpack.c.b16 %v963, %v959
  %v1328 = vpack.c.b16 %v964, %v960
  %v1329 = vpack.c.b16 %v969, %v965
  %v1330 = vpack.c.b16 %v970, %v966
  %v1331 = vpack.c.b16 %v971, %v967
  %v1332 = vpack.c.b16 %v972, %v968
  %v1333 = vpack.c.b16 %v977, %v973
  %v1334 = vpack.c.b16 %v978, %v974
  %v1335 = vpack.c.b16 %v979, %v975
  %v1336 = vpack.c.b16 %v980, %v976
  %v1337 = vpack.c.b16 %v985, %v981
  %v1338 = vpack.c.b16 %v986, %v982
  %v1339 = vpack.c.b16 %v987, %v983
  %v1340 = vpack.c.b16 %v988, %v984
  %v1341 = vpack.c.b16 %v993, %v989
  %v1342 = vpack.c.b16 %v994, %v990
  %v1343 = vpack.c.b16 %v995, %v991
  %v1344 = vpack.c.b16 %v996, %v992
  %v1345 = vpack.c.b16 %v1001, %v997
  %v1346 = vpack.c.b16 %v1002, %v998
  %v1347 = vpack.c.b16 %v1003, %v999
  %v1348 = vpack.c.b16 %v1004, %v1000
  %v1349 = vpack.c.b16 %v1009, %v1005
  %v1350 = vpack.c.b16 %v1010, %v1006
  %v1351 = vpack.c.b16 %v1011, %v1007
  %v1352 = vpack.c.b16 %v1012, %v1008
  %v1353 = vpack.c.b16 %v1017, %v1013
  %v1354 = vpack.c.b16 %v1018, %v1014
  %v1355 = vpack.c.b16 %v1019, %v1015
  %v1356 = vpack.c.b16 %v1020, %v1016
  %v1357 = vpack.c.b16 %v1025, %v1021
  %v1358 = vpack.c.b16 %v1026, %v1022
  %v1359 = vpack.c.b16 %v1027, %v1023
  %v1360 = vpack.c.b16 %v1028, %v1024
  %v1361 = vpack.c.b16 %v1033, %v1029
  %v1362 = vpack.c.b16 %v1034, %v1030
  %v1363 = vpack.c.b16 %v1035, %v1031
  %v1364 = vpack.c.b16 %v1036, %v1032
  %v1365 = vpack.c.b16 %v1041, %v1037
  %v1366 = vpack.c.b16 %v1042, %v1038
  %v1367 = vpack.c.b16 %v1043, %v1039
  %v1368 = vpack.c.b16 %v1044, %v1040
  %v1369 = vpack.c.b16 %v1049, %v1045
  %v1370 = vpack.c.b16 %v1050, %v1046
  %v1371 = vpack.c.b16 %v1051, %v1047
  %v1372 = vpack.c.b16 %v1052, %v1048
  %v1373 = vpack.c.b16 %v1057, %v1053
  %v1374 = vpack.c.b16 %v1058, %v1054
  %v1375 = vpack.c.b16 %v1059, %v1055
  %v1376 = vpack.c.b16 %v1060, %v1056
  %v1377 = vpack.c.b16 %v1065, %v1061
  %v1378 = vpack.c.b16 %v1066, %v1062
  %v1379 = vpack.c.b16 %v1067, %v1063
  %v1380 = vpack.c.b16 %v1068, %v1064
  %v1381 = vpack.c.b16 %v1073, %v1069
  %v1382 = vpack.c.b16 %v1074, %v1070
  %v1383 = vpack.c.b16 %v1075, %v1071
  %v1384 = vpack.c.b16 %v1076, %v1072
  %v1385 = vpack.c.b16 %v1081, %v1077
  %v1386 = vpack.c.b16 %v1082, %v1078
  %v1387 = vpack.c.b16 %v1083, %v1079
  %v1388 = vpack.c.b16 %v1084, %v1080
  %v1389 = vpack.c.b16 %v1089, %v1085
  %v1390 = vpack.c.b16 %v1090, %v1086
  %v1391 = vpack.c.b16 %v1091, %v1087
  %v1392 = vpack.c.b16 %v1092, %v1088
  %v1393 = vpack.c.b16 %v1097, %v1093
  %v1394 = vpack.c.b16 %v1098, %v1094
  %v1395 = vpack.c.b16 %v1099, %v1095
  %v1396 = vpack.c.b16 %v1100, %v1096
  %v1397 = vpack.c.b16 %v1105, %v1101
  %v1398 = vpack.c.b16 %v1106, %v1102
  %v1399 = vpack.c.b16 %v1107, %v1103
  %v1400 = vpack.c.b16 %v1108, %v1104
  %v1401 = vpack.c.b16 %v1113, %v1109
  %v1402 = vpack.c.b16 %v1114, %v1110
  %v1403 = vpack.c.b16 %v1115, %v1111
  %v1404 = vpack.c.b16 %v1116, %v1112
  %v1405 = vpack.c.b16 %v1121, %v1117
  %v1406 = vpack.c.b16 %v1122, %v1118
  %v1407 = vpack.c.b16 %v1123, %v1119
  %v1408 = vpack.c.b16 %v1124, %v1120
  %v1409 = vpack.c.b16 %v1129, %v1125
  %v1410 = vpack.c.b16 %v1130, %v1126
  %v1411 = vpack.c.b16 %v1131, %v1127
  %v1412 = vpack.c.b16 %v1132, %v1128
  %v1413 = vpack.c.b16 %v1137, %v1133
  %v1414 = vpack.c.b16 %v1138, %v1134
  %v1415 = vpack.c.b16 %v1139, %v1135
  %v1416 = vpack.c.b16 %v1140, %v1136
  %v1417 = vpack.c.b16 %v1145, %v1141
  %v1418 = vpack.c.b16 %v1146, %v1142
  %v1419 = vpack.c.b16 %v1147, %v1143
  %v1420 = vpack.c.b16 %v1148, %v1144
  %v1421 = vpack.c.b16 %v1153, %v1149
  %v1422 = vpack.c.b16 %v1154, %v1150
  %v1423 = vpack.c.b16 %v1155, %v1151
  %v1424 = vpack.c.b16 %v1156, %v1152
  %v1425 = vpack.c.b16 %v1161, %v1157
  %v1426 = vpack.c.b16 %v1162, %v1158
  %v1427 = vpack.c.b16 %v1163, %v1159
  %v1428 = vpack.c.b16 %v1164, %v1160
  %v1429 = vpack.c.b16 %v1169, %v1165
  %v1430 = vpack.c.b16 %v1170, %v1166
  %v1431 = vpack.c.b16 %v1171, %v1167
  %v1432 = vpack.c.b16 %v1172, %v1168
  %v1433 = vpack.c.b16 %v1177, %v1173
  %v1434 = vpack.c.b16 %v1178, %v1174
  %v1435 = vpack.c.b16 %v1179, %v1175
  %v1436 = vpack.c.b16 %v1180, %v1176
  %1693 = vmatpush.bf16.msra.mxu0 %v1209
  %1694 = vmatpush.bf16.msra.mxu0 %v1205
  %1695 = vmatpush.bf16.msra.mxu0 %v1201
  %1696 = vmatpush.bf16.msra.mxu0 %v1197
  %1697 = vmatpush.bf16.msra.mxu0 %v1193
  %1698 = vmatpush.bf16.msra.mxu0 %v1189
  %1699 = vmatpush.bf16.msra.mxu0 %v1185
  %1700 = vmatpush.bf16.msra.mxu0 %v1181
  %1701 = vmatmul.bf16.gmra.mxu0 %v43
  %v1702 = vpop.f32.mrf.mxu0
  %v1703 = vadd.f32 %v371, %v1702
  %v1704 = vpop.f32.mrf.mxu0
  %1705 = vdwg.mxu0
  %1706 = vmatpush.bf16.msra.mxu0 %v1241
  %1707 = vmatpush.bf16.msra.mxu0 %v1237
  %1708 = vmatpush.bf16.msra.mxu0 %v1233
  %1709 = vmatpush.bf16.msra.mxu0 %v1229
  %1710 = vmatpush.bf16.msra.mxu0 %v1225
  %1711 = vmatpush.bf16.msra.mxu0 %v1221
  %1712 = vmatpush.bf16.msra.mxu0 %v1217
  %1713 = vmatpush.bf16.msra.mxu0 %v1213
  %1714 = vmatmul.bf16.gmra.mxu0 %v44
  %v1715 = vpop.f32.mrf.mxu0
  %v1716 = vadd.f32 %v1703, %v1715
  %v1717 = vpop.f32.mrf.mxu0
  %1718 = vdwg.mxu0
  %1719 = vmatpush.bf16.msra.mxu0 %v1273
  %1720 = vmatpush.bf16.msra.mxu0 %v1269
  %1721 = vmatpush.bf16.msra.mxu0 %v1265
  %1722 = vmatpush.bf16.msra.mxu0 %v1261
  %1723 = vmatpush.bf16.msra.mxu0 %v1257
  %1724 = vmatpush.bf16.msra.mxu0 %v1253
  %1725 = vmatpush.bf16.msra.mxu0 %v1249
  %1726 = vmatpush.bf16.msra.mxu0 %v1245
  %1727 = vmatmul.bf16.gmra.mxu0 %v45
  %v1728 = vpop.f32.mrf.mxu0
  %v1729 = vadd.f32 %v1716, %v1728
  %v1730 = vpop.f32.mrf.mxu0
  %1731 = vdwg.mxu0
  %1732 = vmatpush.bf16.msra.mxu0 %v1305
  %1733 = vmatpush.bf16.msra.mxu0 %v1301
  %1734 = vmatpush.bf16.msra.mxu0 %v1297
  %1735 = vmatpush.bf16.msra.mxu0 %v1293
  %1736 = vmatpush.bf16.msra.mxu0 %v1289
  %1737 = vmatpush.bf16.msra.mxu0 %v1285
  %1738 = vmatpush.bf16.msra.mxu0 %v1281
  %1739 = vmatpush.bf16.msra.mxu0 %v1277
  %1740 = vmatmul.bf16.gmra.mxu0 %v46
  %v1741 = vpop.f32.mrf.mxu0
  %v1742 = vadd.f32 %v1729, %v1741
  %v1743 = vpop.f32.mrf.mxu0
  %1744 = vdwg.mxu0
  %1745 = vmatpush.bf16.msra.mxu0 %v1337
  %1746 = vmatpush.bf16.msra.mxu0 %v1333
  %1747 = vmatpush.bf16.msra.mxu0 %v1329
  %1748 = vmatpush.bf16.msra.mxu0 %v1325
  %1749 = vmatpush.bf16.msra.mxu0 %v1321
  %1750 = vmatpush.bf16.msra.mxu0 %v1317
  %1751 = vmatpush.bf16.msra.mxu0 %v1313
  %1752 = vmatpush.bf16.msra.mxu0 %v1309
  %1753 = vmatmul.bf16.gmra.mxu0 %v47
  %v1754 = vpop.f32.mrf.mxu0
  %v1755 = vadd.f32 %v1742, %v1754
  %v1756 = vpop.f32.mrf.mxu0
  %1757 = vdwg.mxu0
  %1758 = vmatpush.bf16.msra.mxu0 %v1369
  %1759 = vmatpush.bf16.msra.mxu0 %v1365
  %1760 = vmatpush.bf16.msra.mxu0 %v1361
  %1761 = vmatpush.bf16.msra.mxu0 %v1357
  %1762 = vmatpush.bf16.msra.mxu0 %v1353
  %1763 = vmatpush.bf16.msra.mxu0 %v1349
  %1764 = vmatpush.bf16.msra.mxu0 %v1345
  %1765 = vmatpush.bf16.msra.mxu0 %v1341
  %1766 = vmatmul.bf16.gmra.mxu0 %v48
  %v1767 = vpop.f32.mrf.mxu0
  %v1768 = vadd.f32 %v1755, %v1767
  %v1769 = vpop.f32.mrf.mxu0
  %1770 = vdwg.mxu0
  %1771 = vmatpush.bf16.msra.mxu0 %v1401
  %1772 = vmatpush.bf16.msra.mxu0 %v1397
  %1773 = vmatpush.bf16.msra.mxu0 %v1393
  %1774 = vmatpush.bf16.msra.mxu0 %v1389
  %1775 = vmatpush.bf16.msra.mxu0 %v1385
  %1776 = vmatpush.bf16.msra.mxu0 %v1381
  %1777 = vmatpush.bf16.msra.mxu0 %v1377
  %1778 = vmatpush.bf16.msra.mxu0 %v1373
  %1779 = vmatmul.bf16.gmra.mxu0 %v49
  %v1780 = vpop.f32.mrf.mxu0
  %v1781 = vadd.f32 %v1768, %v1780
  %v1782 = vpop.f32.mrf.mxu0
  %1783 = vdwg.mxu0
  %1784 = vmatpush.bf16.msra.mxu0 %v1433
  %1785 = vmatpush.bf16.msra.mxu0 %v1429
  %1786 = vmatpush.bf16.msra.mxu0 %v1425
  %1787 = vmatpush.bf16.msra.mxu0 %v1421
  %1788 = vmatpush.bf16.msra.mxu0 %v1417
  %1789 = vmatpush.bf16.msra.mxu0 %v1413
  %1790 = vmatpush.bf16.msra.mxu0 %v1409
  %1791 = vmatpush.bf16.msra.mxu0 %v1405
  %1792 = vmatmul.bf16.gmra.mxu0 %v50
  %v1793 = vpop.f32.mrf.mxu0
  %v1794 = vadd.f32 %v1781, %v1793
  %v1795 = vpop.f32.mrf.mxu0
  %1796 = vdwg.mxu0
  %1797 = vmatpush.bf16.msra.mxu0 %v1210
  %1798 = vmatpush.bf16.msra.mxu0 %v1206
  %1799 = vmatpush.bf16.msra.mxu0 %v1202
  %1800 = vmatpush.bf16.msra.mxu0 %v1198
  %1801 = vmatpush.bf16.msra.mxu0 %v1194
  %1802 = vmatpush.bf16.msra.mxu0 %v1190
  %1803 = vmatpush.bf16.msra.mxu0 %v1186
  %1804 = vmatpush.bf16.msra.mxu0 %v1182
  %1805 = vmatmul.bf16.gmra.mxu0 %v43
  %v1806 = vpop.f32.mrf.mxu0
  %v1807 = vadd.f32 %v384, %v1806
  %v1808 = vpop.f32.mrf.mxu0
  %1809 = vdwg.mxu0
  %1810 = vmatpush.bf16.msra.mxu0 %v1242
  %1811 = vmatpush.bf16.msra.mxu0 %v1238
  %1812 = vmatpush.bf16.msra.mxu0 %v1234
  %1813 = vmatpush.bf16.msra.mxu0 %v1230
  %1814 = vmatpush.bf16.msra.mxu0 %v1226
  %1815 = vmatpush.bf16.msra.mxu0 %v1222
  %1816 = vmatpush.bf16.msra.mxu0 %v1218
  %1817 = vmatpush.bf16.msra.mxu0 %v1214
  %1818 = vmatmul.bf16.gmra.mxu0 %v44
  %v1819 = vpop.f32.mrf.mxu0
  %v1820 = vadd.f32 %v1807, %v1819
  %v1821 = vpop.f32.mrf.mxu0
  %1822 = vdwg.mxu0
  %1823 = vmatpush.bf16.msra.mxu0 %v1274
  %1824 = vmatpush.bf16.msra.mxu0 %v1270
  %1825 = vmatpush.bf16.msra.mxu0 %v1266
  %1826 = vmatpush.bf16.msra.mxu0 %v1262
  %1827 = vmatpush.bf16.msra.mxu0 %v1258
  %1828 = vmatpush.bf16.msra.mxu0 %v1254
  %1829 = vmatpush.bf16.msra.mxu0 %v1250
  %1830 = vmatpush.bf16.msra.mxu0 %v1246
  %1831 = vmatmul.bf16.gmra.mxu0 %v45
  %v1832 = vpop.f32.mrf.mxu0
  %v1833 = vadd.f32 %v1820, %v1832
  %v1834 = vpop.f32.mrf.mxu0
  %1835 = vdwg.mxu0
  %1836 = vmatpush.bf16.msra.mxu0 %v1306
  %1837 = vmatpush.bf16.msra.mxu0 %v1302
  %1838 = vmatpush.bf16.msra.mxu0 %v1298
  %1839 = vmatpush.bf16.msra.mxu0 %v1294
  %1840 = vmatpush.bf16.msra.mxu0 %v1290
  %1841 = vmatpush.bf16.msra.mxu0 %v1286
  %1842 = vmatpush.bf16.msra.mxu0 %v1282
  %1843 = vmatpush.bf16.msra.mxu0 %v1278
  %1844 = vmatmul.bf16.gmra.mxu0 %v46
  %v1845 = vpop.f32.mrf.mxu0
  %v1846 = vadd.f32 %v1833, %v1845
  %v1847 = vpop.f32.mrf.mxu0
  %1848 = vdwg.mxu0
  %1849 = vmatpush.bf16.msra.mxu0 %v1338
  %1850 = vmatpush.bf16.msra.mxu0 %v1334
  %1851 = vmatpush.bf16.msra.mxu0 %v1330
  %1852 = vmatpush.bf16.msra.mxu0 %v1326
  %1853 = vmatpush.bf16.msra.mxu0 %v1322
  %1854 = vmatpush.bf16.msra.mxu0 %v1318
  %1855 = vmatpush.bf16.msra.mxu0 %v1314
  %1856 = vmatpush.bf16.msra.mxu0 %v1310
  %1857 = vmatmul.bf16.gmra.mxu0 %v47
  %v1858 = vpop.f32.mrf.mxu0
  %v1859 = vadd.f32 %v1846, %v1858
  %v1860 = vpop.f32.mrf.mxu0
  %1861 = vdwg.mxu0
  %1862 = vmatpush.bf16.msra.mxu0 %v1370
  %1863 = vmatpush.bf16.msra.mxu0 %v1366
  %1864 = vmatpush.bf16.msra.mxu0 %v1362
  %1865 = vmatpush.bf16.msra.mxu0 %v1358
  %1866 = vmatpush.bf16.msra.mxu0 %v1354
  %1867 = vmatpush.bf16.msra.mxu0 %v1350
  %1868 = vmatpush.bf16.msra.mxu0 %v1346
  %1869 = vmatpush.bf16.msra.mxu0 %v1342
  %1870 = vmatmul.bf16.gmra.mxu0 %v48
  %v1871 = vpop.f32.mrf.mxu0
  %v1872 = vadd.f32 %v1859, %v1871
  %v1873 = vpop.f32.mrf.mxu0
  %1874 = vdwg.mxu0
  %1875 = vmatpush.bf16.msra.mxu0 %v1402
  %1876 = vmatpush.bf16.msra.mxu0 %v1398
  %1877 = vmatpush.bf16.msra.mxu0 %v1394
  %1878 = vmatpush.bf16.msra.mxu0 %v1390
  %1879 = vmatpush.bf16.msra.mxu0 %v1386
  %1880 = vmatpush.bf16.msra.mxu0 %v1382
  %1881 = vmatpush.bf16.msra.mxu0 %v1378
  %1882 = vmatpush.bf16.msra.mxu0 %v1374
  %1883 = vmatmul.bf16.gmra.mxu0 %v49
  %v1884 = vpop.f32.mrf.mxu0
  %v1885 = vadd.f32 %v1872, %v1884
  %v1886 = vpop.f32.mrf.mxu0
  %1887 = vdwg.mxu0
  %1888 = vmatpush.bf16.msra.mxu0 %v1434
  %1889 = vmatpush.bf16.msra.mxu0 %v1430
  %1890 = vmatpush.bf16.msra.mxu0 %v1426
  %1891 = vmatpush.bf16.msra.mxu0 %v1422
  %1892 = vmatpush.bf16.msra.mxu0 %v1418
  %1893 = vmatpush.bf16.msra.mxu0 %v1414
  %1894 = vmatpush.bf16.msra.mxu0 %v1410
  %1895 = vmatpush.bf16.msra.mxu0 %v1406
  %1896 = vmatmul.bf16.gmra.mxu0 %v50
  %v1897 = vpop.f32.mrf.mxu0
  %v1898 = vadd.f32 %v1885, %v1897
  %v1899 = vpop.f32.mrf.mxu0
  %1900 = vdwg.mxu0
  %1901 = vmatpush.bf16.msra.mxu0 %v1211
  %1902 = vmatpush.bf16.msra.mxu0 %v1207
  %1903 = vmatpush.bf16.msra.mxu0 %v1203
  %1904 = vmatpush.bf16.msra.mxu0 %v1199
  %1905 = vmatpush.bf16.msra.mxu0 %v1195
  %1906 = vmatpush.bf16.msra.mxu0 %v1191
  %1907 = vmatpush.bf16.msra.mxu0 %v1187
  %1908 = vmatpush.bf16.msra.mxu0 %v1183
  %1909 = vmatmul.bf16.gmra.mxu0 %v43
  %v1910 = vpop.f32.mrf.mxu0
  %v1911 = vadd.f32 %v397, %v1910
  %v1912 = vpop.f32.mrf.mxu0
  %1913 = vdwg.mxu0
  %1914 = vmatpush.bf16.msra.mxu0 %v1243
  %1915 = vmatpush.bf16.msra.mxu0 %v1239
  %1916 = vmatpush.bf16.msra.mxu0 %v1235
  %1917 = vmatpush.bf16.msra.mxu0 %v1231
  %1918 = vmatpush.bf16.msra.mxu0 %v1227
  %1919 = vmatpush.bf16.msra.mxu0 %v1223
  %1920 = vmatpush.bf16.msra.mxu0 %v1219
  %1921 = vmatpush.bf16.msra.mxu0 %v1215
  %1922 = vmatmul.bf16.gmra.mxu0 %v44
  %v1923 = vpop.f32.mrf.mxu0
  %v1924 = vadd.f32 %v1911, %v1923
  %v1925 = vpop.f32.mrf.mxu0
  %1926 = vdwg.mxu0
  %1927 = vmatpush.bf16.msra.mxu0 %v1275
  %1928 = vmatpush.bf16.msra.mxu0 %v1271
  %1929 = vmatpush.bf16.msra.mxu0 %v1267
  %1930 = vmatpush.bf16.msra.mxu0 %v1263
  %1931 = vmatpush.bf16.msra.mxu0 %v1259
  %1932 = vmatpush.bf16.msra.mxu0 %v1255
  %1933 = vmatpush.bf16.msra.mxu0 %v1251
  %1934 = vmatpush.bf16.msra.mxu0 %v1247
  %1935 = vmatmul.bf16.gmra.mxu0 %v45
  %v1936 = vpop.f32.mrf.mxu0
  %v1937 = vadd.f32 %v1924, %v1936
  %v1938 = vpop.f32.mrf.mxu0
  %1939 = vdwg.mxu0
  %1940 = vmatpush.bf16.msra.mxu0 %v1307
  %1941 = vmatpush.bf16.msra.mxu0 %v1303
  %1942 = vmatpush.bf16.msra.mxu0 %v1299
  %1943 = vmatpush.bf16.msra.mxu0 %v1295
  %1944 = vmatpush.bf16.msra.mxu0 %v1291
  %1945 = vmatpush.bf16.msra.mxu0 %v1287
  %1946 = vmatpush.bf16.msra.mxu0 %v1283
  %1947 = vmatpush.bf16.msra.mxu0 %v1279
  %1948 = vmatmul.bf16.gmra.mxu0 %v46
  %v1949 = vpop.f32.mrf.mxu0
  %v1950 = vadd.f32 %v1937, %v1949
  %v1951 = vpop.f32.mrf.mxu0
  %1952 = vdwg.mxu0
  %1953 = vmatpush.bf16.msra.mxu0 %v1339
  %1954 = vmatpush.bf16.msra.mxu0 %v1335
  %1955 = vmatpush.bf16.msra.mxu0 %v1331
  %1956 = vmatpush.bf16.msra.mxu0 %v1327
  %1957 = vmatpush.bf16.msra.mxu0 %v1323
  %1958 = vmatpush.bf16.msra.mxu0 %v1319
  %1959 = vmatpush.bf16.msra.mxu0 %v1315
  %1960 = vmatpush.bf16.msra.mxu0 %v1311
  %1961 = vmatmul.bf16.gmra.mxu0 %v47
  %v1962 = vpop.f32.mrf.mxu0
  %v1963 = vadd.f32 %v1950, %v1962
  %v1964 = vpop.f32.mrf.mxu0
  %1965 = vdwg.mxu0
  %1966 = vmatpush.bf16.msra.mxu0 %v1371
  %1967 = vmatpush.bf16.msra.mxu0 %v1367
  %1968 = vmatpush.bf16.msra.mxu0 %v1363
  %1969 = vmatpush.bf16.msra.mxu0 %v1359
  %1970 = vmatpush.bf16.msra.mxu0 %v1355
  %1971 = vmatpush.bf16.msra.mxu0 %v1351
  %1972 = vmatpush.bf16.msra.mxu0 %v1347
  %1973 = vmatpush.bf16.msra.mxu0 %v1343
  %1974 = vmatmul.bf16.gmra.mxu0 %v48
  %v1975 = vpop.f32.mrf.mxu0
  %v1976 = vadd.f32 %v1963, %v1975
  %v1977 = vpop.f32.mrf.mxu0
  %1978 = vdwg.mxu0
  %1979 = vmatpush.bf16.msra.mxu0 %v1403
  %1980 = vmatpush.bf16.msra.mxu0 %v1399
  %1981 = vmatpush.bf16.msra.mxu0 %v1395
  %1982 = vmatpush.bf16.msra.mxu0 %v1391
  %1983 = vmatpush.bf16.msra.mxu0 %v1387
  %1984 = vmatpush.bf16.msra.mxu0 %v1383
  %1985 = vmatpush.bf16.msra.mxu0 %v1379
  %1986 = vmatpush.bf16.msra.mxu0 %v1375
  %1987 = vmatmul.bf16.gmra.mxu0 %v49
  %v1988 = vpop.f32.mrf.mxu0
  %v1989 = vadd.f32 %v1976, %v1988
  %v1990 = vpop.f32.mrf.mxu0
  %1991 = vdwg.mxu0
  %1992 = vmatpush.bf16.msra.mxu0 %v1435
  %1993 = vmatpush.bf16.msra.mxu0 %v1431
  %1994 = vmatpush.bf16.msra.mxu0 %v1427
  %1995 = vmatpush.bf16.msra.mxu0 %v1423
  %1996 = vmatpush.bf16.msra.mxu0 %v1419
  %1997 = vmatpush.bf16.msra.mxu0 %v1415
  %1998 = vmatpush.bf16.msra.mxu0 %v1411
  %1999 = vmatpush.bf16.msra.mxu0 %v1407
  %2000 = vmatmul.bf16.gmra.mxu0 %v50
  %v2001 = vpop.f32.mrf.mxu0
  %v2002 = vadd.f32 %v1989, %v2001
  %v2003 = vpop.f32.mrf.mxu0
  %2004 = vdwg.mxu0
  %2005 = vmatpush.bf16.msra.mxu0 %v1212
  %2006 = vmatpush.bf16.msra.mxu0 %v1208
  %2007 = vmatpush.bf16.msra.mxu0 %v1204
  %2008 = vmatpush.bf16.msra.mxu0 %v1200
  %2009 = vmatpush.bf16.msra.mxu0 %v1196
  %2010 = vmatpush.bf16.msra.mxu0 %v1192
  %2011 = vmatpush.bf16.msra.mxu0 %v1188
  %2012 = vmatpush.bf16.msra.mxu0 %v1184
  %2013 = vmatmul.bf16.gmra.mxu0 %v43
  %v2014 = vpop.f32.mrf.mxu0
  %v2015 = vadd.f32 %v410, %v2014
  %v2016 = vpop.f32.mrf.mxu0
  %2017 = vdwg.mxu0
  %2018 = vmatpush.bf16.msra.mxu0 %v1244
  %2019 = vmatpush.bf16.msra.mxu0 %v1240
  %2020 = vmatpush.bf16.msra.mxu0 %v1236
  %2021 = vmatpush.bf16.msra.mxu0 %v1232
  %2022 = vmatpush.bf16.msra.mxu0 %v1228
  %2023 = vmatpush.bf16.msra.mxu0 %v1224
  %2024 = vmatpush.bf16.msra.mxu0 %v1220
  %2025 = vmatpush.bf16.msra.mxu0 %v1216
  %2026 = vmatmul.bf16.gmra.mxu0 %v44
  %v2027 = vpop.f32.mrf.mxu0
  %v2028 = vadd.f32 %v2015, %v2027
  %v2029 = vpop.f32.mrf.mxu0
  %2030 = vdwg.mxu0
  %2031 = vmatpush.bf16.msra.mxu0 %v1276
  %2032 = vmatpush.bf16.msra.mxu0 %v1272
  %2033 = vmatpush.bf16.msra.mxu0 %v1268
  %2034 = vmatpush.bf16.msra.mxu0 %v1264
  %2035 = vmatpush.bf16.msra.mxu0 %v1260
  %2036 = vmatpush.bf16.msra.mxu0 %v1256
  %2037 = vmatpush.bf16.msra.mxu0 %v1252
  %2038 = vmatpush.bf16.msra.mxu0 %v1248
  %2039 = vmatmul.bf16.gmra.mxu0 %v45
  %v2040 = vpop.f32.mrf.mxu0
  %v2041 = vadd.f32 %v2028, %v2040
  %v2042 = vpop.f32.mrf.mxu0
  %2043 = vdwg.mxu0
  %2044 = vmatpush.bf16.msra.mxu0 %v1308
  %2045 = vmatpush.bf16.msra.mxu0 %v1304
  %2046 = vmatpush.bf16.msra.mxu0 %v1300
  %2047 = vmatpush.bf16.msra.mxu0 %v1296
  %2048 = vmatpush.bf16.msra.mxu0 %v1292
  %2049 = vmatpush.bf16.msra.mxu0 %v1288
  %2050 = vmatpush.bf16.msra.mxu0 %v1284
  %2051 = vmatpush.bf16.msra.mxu0 %v1280
  %2052 = vmatmul.bf16.gmra.mxu0 %v46
  %v2053 = vpop.f32.mrf.mxu0
  %v2054 = vadd.f32 %v2041, %v2053
  %v2055 = vpop.f32.mrf.mxu0
  %2056 = vdwg.mxu0
  %2057 = vmatpush.bf16.msra.mxu0 %v1340
  %2058 = vmatpush.bf16.msra.mxu0 %v1336
  %2059 = vmatpush.bf16.msra.mxu0 %v1332
  %2060 = vmatpush.bf16.msra.mxu0 %v1328
  %2061 = vmatpush.bf16.msra.mxu0 %v1324
  %2062 = vmatpush.bf16.msra.mxu0 %v1320
  %2063 = vmatpush.bf16.msra.mxu0 %v1316
  %2064 = vmatpush.bf16.msra.mxu0 %v1312
  %2065 = vmatmul.bf16.gmra.mxu0 %v47
  %v2066 = vpop.f32.mrf.mxu0
  %v2067 = vadd.f32 %v2054, %v2066
  %v2068 = vpop.f32.mrf.mxu0
  %2069 = vdwg.mxu0
  %2070 = vmatpush.bf16.msra.mxu0 %v1372
  %2071 = vmatpush.bf16.msra.mxu0 %v1368
  %2072 = vmatpush.bf16.msra.mxu0 %v1364
  %2073 = vmatpush.bf16.msra.mxu0 %v1360
  %2074 = vmatpush.bf16.msra.mxu0 %v1356
  %2075 = vmatpush.bf16.msra.mxu0 %v1352
  %2076 = vmatpush.bf16.msra.mxu0 %v1348
  %2077 = vmatpush.bf16.msra.mxu0 %v1344
  %2078 = vmatmul.bf16.gmra.mxu0 %v48
  %v2079 = vpop.f32.mrf.mxu0
  %v2080 = vadd.f32 %v2067, %v2079
  %v2081 = vpop.f32.mrf.mxu0
  %2082 = vdwg.mxu0
  %2083 = vmatpush.bf16.msra.mxu0 %v1404
  %2084 = vmatpush.bf16.msra.mxu0 %v1400
  %2085 = vmatpush.bf16.msra.mxu0 %v1396
  %2086 = vmatpush.bf16.msra.mxu0 %v1392
  %2087 = vmatpush.bf16.msra.mxu0 %v1388
  %2088 = vmatpush.bf16.msra.mxu0 %v1384
  %2089 = vmatpush.bf16.msra.mxu0 %v1380
  %2090 = vmatpush.bf16.msra.mxu0 %v1376
  %2091 = vmatmul.bf16.gmra.mxu0 %v49
  %v2092 = vpop.f32.mrf.mxu0
  %v2093 = vadd.f32 %v2080, %v2092
  %v2094 = vpop.f32.mrf.mxu0
  %2095 = vdwg.mxu0
  %2096 = vmatpush.bf16.msra.mxu0 %v1436
  %2097 = vmatpush.bf16.msra.mxu0 %v1432
  %2098 = vmatpush.bf16.msra.mxu0 %v1428
  %2099 = vmatpush.bf16.msra.mxu0 %v1424
  %2100 = vmatpush.bf16.msra.mxu0 %v1420
  %2101 = vmatpush.bf16.msra.mxu0 %v1416
  %2102 = vmatpush.bf16.msra.mxu0 %v1412
  %2103 = vmatpush.bf16.msra.mxu0 %v1408
  %2104 = vmatmul.bf16.gmra.mxu0 %v50
  %v2105 = vpop.f32.mrf.mxu0
  %v2106 = vadd.f32 %v2093, %v2105
  %v2107 = vpop.f32.mrf.mxu0
  %2108 = vdwg.mxu0
  %v2109 = vld [vmem:[%s4] sm:$0xf]
  %v2111 = vperm.slane %v2109, 0
  %v2112 = vperm.slane %v2109, 1
  %v2113 = vperm.slane %v2109, 2
  %v2114 = vperm.slane %v2109, 3
  %v2119 = vadd.f32 %v1794, %v2111
  %v2120 = vadd.f32 %v1898, %v2112
  %v2121 = vadd.f32 %v2002, %v2113
  %v2122 = vadd.f32 %v2106, %v2114
  %vm2123 = vcmp.gt.f32.partialorder %v2119, 0.0
  %vm2124 = vcmp.gt.f32.partialorder %v2120, 0.0
  %vm2125 = vcmp.gt.f32.partialorder %v2121, 0.0
  %vm2126 = vcmp.gt.f32.partialorder %v2122, 0.0
  %v2127 = vmul.f32 %v2119, 0.01
  %v2128 = vmul.f32 %v2120, 0.01
  %v2129 = vmul.f32 %v2121, 0.01
  %v2130 = vmul.f32 %v2122, 0.01
  %v2131 = vsel %vm2123, %v2119, %v2127
  %v2132 = vsel %vm2124, %v2120, %v2128
  %v2133 = vsel %vm2125, %v2121, %v2129
  %v2134 = vsel %vm2126, %v2122, %v2130
  %v2135 = vpack.c.bf16 %v2131, %v2131
  %v2136 = vpack.c.bf16 %v2132, %v2132
  %v2137 = vpack.c.bf16 %v2133, %v2133
  %v2138 = vpack.c.bf16 %v2134, %v2134
  %v2139 = vld [vmem:[%s5] sm:$0xff]
  %v2140 = vld [vmem:[%s5 + $0x8] sm:$0xff]
  %v2141 = vld [vmem:[%s5 + $0x10] sm:$0xff]
  %v2142 = vld [vmem:[%s5 + $0x18] sm:$0xff]
  %v2143 = vld [vmem:[%s5 + $0x20] sm:$0xff]
  %v2144 = vld [vmem:[%s5 + $0x28] sm:$0xff]
  %v2145 = vld [vmem:[%s5 + $0x30] sm:$0xff]
  %v2146 = vld [vmem:[%s5 + $0x38] sm:$0xff]
  %v2147 = vld [vmem:[%s5 + $0x40] sm:$0xff]
  %v2148 = vld [vmem:[%s5 + $0x48] sm:$0xff]
  %v2149 = vld [vmem:[%s5 + $0x50] sm:$0xff]
  %v2150 = vld [vmem:[%s5 + $0x58] sm:$0xff]
  %v2151 = vld [vmem:[%s5 + $0x60] sm:$0xff]
  %v2152 = vld [vmem:[%s5 + $0x68] sm:$0xff]
  %v2153 = vld [vmem:[%s5 + $0x70] sm:$0xff]
  %v2154 = vld [vmem:[%s5 + $0x78] sm:$0xff]
  %v2155 = vld [vmem:[%s5 + $0x80] sm:$0xff]
  %v2156 = vld [vmem:[%s5 + $0x88] sm:$0xff]
  %v2157 = vld [vmem:[%s5 + $0x90] sm:$0xff]
  %v2158 = vld [vmem:[%s5 + $0x98] sm:$0xff]
  %v2159 = vld [vmem:[%s5 + $0xa0] sm:$0xff]
  %v2160 = vld [vmem:[%s5 + $0xa8] sm:$0xff]
  %v2161 = vld [vmem:[%s5 + $0xb0] sm:$0xff]
  %v2162 = vld [vmem:[%s5 + $0xb8] sm:$0xff]
  %v2163 = vld [vmem:[%s5 + $0xc0] sm:$0xff]
  %v2164 = vld [vmem:[%s5 + $0xc8] sm:$0xff]
  %v2165 = vld [vmem:[%s5 + $0xd0] sm:$0xff]
  %v2166 = vld [vmem:[%s5 + $0xd8] sm:$0xff]
  %v2167 = vld [vmem:[%s5 + $0xe0] sm:$0xff]
  %v2168 = vld [vmem:[%s5 + $0xe8] sm:$0xff]
  %v2169 = vld [vmem:[%s5 + $0xf0] sm:$0xff]
  %v2170 = vld [vmem:[%s5 + $0xf8] sm:$0xff]
  %v2171 = vld [vmem:[%s5 + $0x100] sm:$0xff]
  %v2172 = vld [vmem:[%s5 + $0x108] sm:$0xff]
  %v2173 = vld [vmem:[%s5 + $0x110] sm:$0xff]
  %v2174 = vld [vmem:[%s5 + $0x118] sm:$0xff]
  %v2175 = vld [vmem:[%s5 + $0x120] sm:$0xff]
  %v2176 = vld [vmem:[%s5 + $0x128] sm:$0xff]
  %v2177 = vld [vmem:[%s5 + $0x130] sm:$0xff]
  %v2178 = vld [vmem:[%s5 + $0x138] sm:$0xff]
  %v2179 = vld [vmem:[%s5 + $0x140] sm:$0xff]
  %v2180 = vld [vmem:[%s5 + $0x148] sm:$0xff]
  %v2181 = vld [vmem:[%s5 + $0x150] sm:$0xff]
  %v2182 = vld [vmem:[%s5 + $0x158] sm:$0xff]
  %v2183 = vld [vmem:[%s5 + $0x160] sm:$0xff]
  %v2184 = vld [vmem:[%s5 + $0x168] sm:$0xff]
  %v2185 = vld [vmem:[%s5 + $0x170] sm:$0xff]
  %v2186 = vld [vmem:[%s5 + $0x178] sm:$0xff]
  %v2187 = vld [vmem:[%s5 + $0x180] sm:$0xff]
  %v2188 = vld [vmem:[%s5 + $0x188] sm:$0xff]
  %v2189 = vld [vmem:[%s5 + $0x190] sm:$0xff]
  %v2190 = vld [vmem:[%s5 + $0x198] sm:$0xff]
  %v2191 = vld [vmem:[%s5 + $0x1a0] sm:$0xff]
  %v2192 = vld [vmem:[%s5 + $0x1a8] sm:$0xff]
  %v2193 = vld [vmem:[%s5 + $0x1b0] sm:$0xff]
  %v2194 = vld [vmem:[%s5 + $0x1b8] sm:$0xff]
  %v2195 = vld [vmem:[%s5 + $0x1c0] sm:$0xff]
  %v2196 = vld [vmem:[%s5 + $0x1c8] sm:$0xff]
  %v2197 = vld [vmem:[%s5 + $0x1d0] sm:$0xff]
  %v2198 = vld [vmem:[%s5 + $0x1d8] sm:$0xff]
  %v2199 = vld [vmem:[%s5 + $0x1e0] sm:$0xff]
  %v2200 = vld [vmem:[%s5 + $0x1e8] sm:$0xff]
  %v2201 = vld [vmem:[%s5 + $0x1f0] sm:$0xff]
  %v2202 = vld [vmem:[%s5 + $0x1f8] sm:$0xff]
  %v2203 = vld [vmem:[%s6] sm:$0x3]
  %v2205 = vperm.slane %v2203, 0
  %v2206 = vperm.slane %v2203, 1
  %v2273 = vunpack.c.l.b16 %v2139
  %v2274 = vunpack.c.h.b16 %v2139
  %v2275 = vunpack.c.l.b16 %v2140
  %v2276 = vunpack.c.h.b16 %v2140
  %v2277 = vunpack.c.l.b16 %v2141
  %v2278 = vunpack.c.h.b16 %v2141
  %v2279 = vunpack.c.l.b16 %v2142
  %v2280 = vunpack.c.h.b16 %v2142
  %v2281 = vunpack.c.l.b16 %v2143
  %v2282 = vunpack.c.h.b16 %v2143
  %v2283 = vunpack.c.l.b16 %v2144
  %v2284 = vunpack.c.h.b16 %v2144
  %v2285 = vunpack.c.l.b16 %v2145
  %v2286 = vunpack.c.h.b16 %v2145
  %v2287 = vunpack.c.l.b16 %v2146
  %v2288 = vunpack.c.h.b16 %v2146
  %v2289 = vunpack.c.l.b16 %v2147
  %v2290 = vunpack.c.h.b16 %v2147
  %v2291 = vunpack.c.l.b16 %v2148
  %v2292 = vunpack.c.h.b16 %v2148
  %v2293 = vunpack.c.l.b16 %v2149
  %v2294 = vunpack.c.h.b16 %v2149
  %v2295 = vunpack.c.l.b16 %v2150
  %v2296 = vunpack.c.h.b16 %v2150
  %v2297 = vunpack.c.l.b16 %v2151
  %v2298 = vunpack.c.h.b16 %v2151
  %v2299 = vunpack.c.l.b16 %v2152
  %v2300 = vunpack.c.h.b16 %v2152
  %v2301 = vunpack.c.l.b16 %v2153
  %v2302 = vunpack.c.h.b16 %v2153
  %v2303 = vunpack.c.l.b16 %v2154
  %v2304 = vunpack.c.h.b16 %v2154
  %v2305 = vunpack.c.l.b16 %v2155
  %v2306 = vunpack.c.h.b16 %v2155
  %v2307 = vunpack.c.l.b16 %v2156
  %v2308 = vunpack.c.h.b16 %v2156
  %v2309 = vunpack.c.l.b16 %v2157
  %v2310 = vunpack.c.h.b16 %v2157
  %v2311 = vunpack.c.l.b16 %v2158
  %v2312 = vunpack.c.h.b16 %v2158
  %v2313 = vunpack.c.l.b16 %v2159
  %v2314 = vunpack.c.h.b16 %v2159
  %v2315 = vunpack.c.l.b16 %v2160
  %v2316 = vunpack.c.h.b16 %v2160
  %v2317 = vunpack.c.l.b16 %v2161
  %v2318 = vunpack.c.h.b16 %v2161
  %v2319 = vunpack.c.l.b16 %v2162
  %v2320 = vunpack.c.h.b16 %v2162
  %v2321 = vunpack.c.l.b16 %v2163
  %v2322 = vunpack.c.h.b16 %v2163
  %v2323 = vunpack.c.l.b16 %v2164
  %v2324 = vunpack.c.h.b16 %v2164
  %v2325 = vunpack.c.l.b16 %v2165
  %v2326 = vunpack.c.h.b16 %v2165
  %v2327 = vunpack.c.l.b16 %v2166
  %v2328 = vunpack.c.h.b16 %v2166
  %v2329 = vunpack.c.l.b16 %v2167
  %v2330 = vunpack.c.h.b16 %v2167
  %v2331 = vunpack.c.l.b16 %v2168
  %v2332 = vunpack.c.h.b16 %v2168
  %v2333 = vunpack.c.l.b16 %v2169
  %v2334 = vunpack.c.h.b16 %v2169
  %v2335 = vunpack.c.l.b16 %v2170
  %v2336 = vunpack.c.h.b16 %v2170
  %v2337 = vunpack.c.l.b16 %v2171
  %v2338 = vunpack.c.h.b16 %v2171
  %v2339 = vunpack.c.l.b16 %v2172
  %v2340 = vunpack.c.h.b16 %v2172
  %v2341 = vunpack.c.l.b16 %v2173
  %v2342 = vunpack.c.h.b16 %v2173
  %v2343 = vunpack.c.l.b16 %v2174
  %v2344 = vunpack.c.h.b16 %v2174
  %v2345 = vunpack.c.l.b16 %v2175
  %v2346 = vunpack.c.h.b16 %v2175
  %v2347 = vunpack.c.l.b16 %v2176
  %v2348 = vunpack.c.h.b16 %v2176
  %v2349 = vunpack.c.l.b16 %v2177
  %v2350 = vunpack.c.h.b16 %v2177
  %v2351 = vunpack.c.l.b16 %v2178
  %v2352 = vunpack.c.h.b16 %v2178
  %v2353 = vunpack.c.l.b16 %v2179
  %v2354 = vunpack.c.h.b16 %v2179
  %v2355 = vunpack.c.l.b16 %v2180
  %v2356 = vunpack.c.h.b16 %v2180
  %v2357 = vunpack.c.l.b16 %v2181
  %v2358 = vunpack.c.h.b16 %v2181
  %v2359 = vunpack.c.l.b16 %v2182
  %v2360 = vunpack.c.h.b16 %v2182
  %v2361 = vunpack.c.l.b16 %v2183
  %v2362 = vunpack.c.h.b16 %v2183
  %v2363 = vunpack.c.l.b16 %v2184
  %v2364 = vunpack.c.h.b16 %v2184
  %v2365 = vunpack.c.l.b16 %v2185
  %v2366 = vunpack.c.h.b16 %v2185
  %v2367 = vunpack.c.l.b16 %v2186
  %v2368 = vunpack.c.h.b16 %v2186
  %v2369 = vunpack.c.l.b16 %v2187
  %v2370 = vunpack.c.h.b16 %v2187
  %v2371 = vunpack.c.l.b16 %v2188
  %v2372 = vunpack.c.h.b16 %v2188
  %v2373 = vunpack.c.l.b16 %v2189
  %v2374 = vunpack.c.h.b16 %v2189
  %v2375 = vunpack.c.l.b16 %v2190
  %v2376 = vunpack.c.h.b16 %v2190
  %v2377 = vunpack.c.l.b16 %v2191
  %v2378 = vunpack.c.h.b16 %v2191
  %v2379 = vunpack.c.l.b16 %v2192
  %v2380 = vunpack.c.h.b16 %v2192
  %v2381 = vunpack.c.l.b16 %v2193
  %v2382 = vunpack.c.h.b16 %v2193
  %v2383 = vunpack.c.l.b16 %v2194
  %v2384 = vunpack.c.h.b16 %v2194
  %v2385 = vunpack.c.l.b16 %v2195
  %v2386 = vunpack.c.h.b16 %v2195
  %v2387 = vunpack.c.l.b16 %v2196
  %v2388 = vunpack.c.h.b16 %v2196
  %v2389 = vunpack.c.l.b16 %v2197
  %v2390 = vunpack.c.h.b16 %v2197
  %v2391 = vunpack.c.l.b16 %v2198
  %v2392 = vunpack.c.h.b16 %v2198
  %v2393 = vunpack.c.l.b16 %v2199
  %v2394 = vunpack.c.h.b16 %v2199
  %v2395 = vunpack.c.l.b16 %v2200
  %v2396 = vunpack.c.h.b16 %v2200
  %v2397 = vunpack.c.l.b16 %v2201
  %v2398 = vunpack.c.h.b16 %v2201
  %v2399 = vunpack.c.l.b16 %v2202
  %v2400 = vunpack.c.h.b16 %v2202
  %v2401 = vpack.c.b16 %v2275, %v2273
  %v2402 = vpack.c.b16 %v2276, %v2274
  %v2403 = vpack.c.b16 %v2279, %v2277
  %v2404 = vpack.c.b16 %v2280, %v2278
  %v2405 = vpack.c.b16 %v2283, %v2281
  %v2406 = vpack.c.b16 %v2284, %v2282
  %v2407 = vpack.c.b16 %v2287, %v2285
  %v2408 = vpack.c.b16 %v2288, %v2286
  %v2409 = vpack.c.b16 %v2291, %v2289
  %v2410 = vpack.c.b16 %v2292, %v2290
  %v2411 = vpack.c.b16 %v2295, %v2293
  %v2412 = vpack.c.b16 %v2296, %v2294
  %v2413 = vpack.c.b16 %v2299, %v2297
  %v2414 = vpack.c.b16 %v2300, %v2298
  %v2415 = vpack.c.b16 %v2303, %v2301
  %v2416 = vpack.c.b16 %v2304, %v2302
  %v2417 = vpack.c.b16 %v2307, %v2305
  %v2418 = vpack.c.b16 %v2308, %v2306
  %v2419 = vpack.c.b16 %v2311, %v2309
  %v2420 = vpack.c.b16 %v2312, %v2310
  %v2421 = vpack.c.b16 %v2315, %v2313
  %v2422 = vpack.c.b16 %v2316, %v2314
  %v2423 = vpack.c.b16 %v2319, %v2317
  %v2424 = vpack.c.b16 %v2320, %v2318
  %v2425 = vpack.c.b16 %v2323, %v2321
  %v2426 = vpack.c.b16 %v2324, %v2322
  %v2427 = vpack.c.b16 %v2327, %v2325
  %v2428 = vpack.c.b16 %v2328, %v2326
  %v2429 = vpack.c.b16 %v2331, %v2329
  %v2430 = vpack.c.b16 %v2332, %v2330
  %v2431 = vpack.c.b16 %v2335, %v2333
  %v2432 = vpack.c.b16 %v2336, %v2334
  %v2433 = vpack.c.b16 %v2339, %v2337
  %v2434 = vpack.c.b16 %v2340, %v2338
  %v2435 = vpack.c.b16 %v2343, %v2341
  %v2436 = vpack.c.b16 %v2344, %v2342
  %v2437 = vpack.c.b16 %v2347, %v2345
  %v2438 = vpack.c.b16 %v2348, %v2346
  %v2439 = vpack.c.b16 %v2351, %v2349
  %v2440 = vpack.c.b16 %v2352, %v2350
  %v2441 = vpack.c.b16 %v2355, %v2353
  %v2442 = vpack.c.b16 %v2356, %v2354
  %v2443 = vpack.c.b16 %v2359, %v2357
  %v2444 = vpack.c.b16 %v2360, %v2358
  %v2445 = vpack.c.b16 %v2363, %v2361
  %v2446 = vpack.c.b16 %v2364, %v2362
  %v2447 = vpack.c.b16 %v2367, %v2365
  %v2448 = vpack.c.b16 %v2368, %v2366
  %v2449 = vpack.c.b16 %v2371, %v2369
  %v2450 = vpack.c.b16 %v2372, %v2370
  %v2451 = vpack.c.b16 %v2375, %v2373
  %v2452 = vpack.c.b16 %v2376, %v2374
  %v2453 = vpack.c.b16 %v2379, %v2377
  %v2454 = vpack.c.b16 %v2380, %v2378
  %v2455 = vpack.c.b16 %v2383, %v2381
  %v2456 = vpack.c.b16 %v2384, %v2382
  %v2457 = vpack.c.b16 %v2387, %v2385
  %v2458 = vpack.c.b16 %v2388, %v2386
  %v2459 = vpack.c.b16 %v2391, %v2389
  %v2460 = vpack.c.b16 %v2392, %v2390
  %v2461 = vpack.c.b16 %v2395, %v2393
  %v2462 = vpack.c.b16 %v2396, %v2394
  %v2463 = vpack.c.b16 %v2399, %v2397
  %v2464 = vpack.c.b16 %v2400, %v2398
  %2529 = vmatpush.bf16.msra.mxu0 %v2415
  %2530 = vmatpush.bf16.msra.mxu0 %v2413
  %2531 = vmatpush.bf16.msra.mxu0 %v2411
  %2532 = vmatpush.bf16.msra.mxu0 %v2409
  %2533 = vmatpush.bf16.msra.mxu0 %v2407
  %2534 = vmatpush.bf16.msra.mxu0 %v2405
  %2535 = vmatpush.bf16.msra.mxu0 %v2403
  %2536 = vmatpush.bf16.msra.mxu0 %v2401
  %2537 = vmatmul.bf16.gmra.mxu0 %v2135
  %v2538 = vpop.f32.mrf.mxu0
  %v2539 = vadd.f32 %v2205, %v2538
  %v2540 = vpop.f32.mrf.mxu0
  %2541 = vdwg.mxu0
  %2542 = vmatpush.bf16.msra.mxu0 %v2431
  %2543 = vmatpush.bf16.msra.mxu0 %v2429
  %2544 = vmatpush.bf16.msra.mxu0 %v2427
  %2545 = vmatpush.bf16.msra.mxu0 %v2425
  %2546 = vmatpush.bf16.msra.mxu0 %v2423
  %2547 = vmatpush.bf16.msra.mxu0 %v2421
  %2548 = vmatpush.bf16.msra.mxu0 %v2419
  %2549 = vmatpush.bf16.msra.mxu0 %v2417
  %2550 = vmatmul.bf16.gmra.mxu0 %v2136
  %v2551 = vpop.f32.mrf.mxu0
  %v2552 = vadd.f32 %v2539, %v2551
  %v2553 = vpop.f32.mrf.mxu0
  %2554 = vdwg.mxu0
  %2555 = vmatpush.bf16.msra.mxu0 %v2447
  %2556 = vmatpush.bf16.msra.mxu0 %v2445
  %2557 = vmatpush.bf16.msra.mxu0 %v2443
  %2558 = vmatpush.bf16.msra.mxu0 %v2441
  %2559 = vmatpush.bf16.msra.mxu0 %v2439
  %2560 = vmatpush.bf16.msra.mxu0 %v2437
  %2561 = vmatpush.bf16.msra.mxu0 %v2435
  %2562 = vmatpush.bf16.msra.mxu0 %v2433
  %2563 = vmatmul.bf16.gmra.mxu0 %v2137
  %v2564 = vpop.f32.mrf.mxu0
  %v2565 = vadd.f32 %v2552, %v2564
  %v2566 = vpop.f32.mrf.mxu0
  %2567 = vdwg.mxu0
  %2568 = vmatpush.bf16.msra.mxu0 %v2463
  %2569 = vmatpush.bf16.msra.mxu0 %v2461
  %2570 = vmatpush.bf16.msra.mxu0 %v2459
  %2571 = vmatpush.bf16.msra.mxu0 %v2457
  %2572 = vmatpush.bf16.msra.mxu0 %v2455
  %2573 = vmatpush.bf16.msra.mxu0 %v2453
  %2574 = vmatpush.bf16.msra.mxu0 %v2451
  %2575 = vmatpush.bf16.msra.mxu0 %v2449
  %2576 = vmatmul.bf16.gmra.mxu0 %v2138
  %v2577 = vpop.f32.mrf.mxu0
  %v2578 = vadd.f32 %v2565, %v2577
  %v2579 = vpop.f32.mrf.mxu0
  %2580 = vdwg.mxu0
  %2581 = vmatpush.bf16.msra.mxu0 %v2416
  %2582 = vmatpush.bf16.msra.mxu0 %v2414
  %2583 = vmatpush.bf16.msra.mxu0 %v2412
  %2584 = vmatpush.bf16.msra.mxu0 %v2410
  %2585 = vmatpush.bf16.msra.mxu0 %v2408
  %2586 = vmatpush.bf16.msra.mxu0 %v2406
  %2587 = vmatpush.bf16.msra.mxu0 %v2404
  %2588 = vmatpush.bf16.msra.mxu0 %v2402
  %2589 = vmatmul.bf16.gmra.mxu0 %v2135
  %v2590 = vpop.f32.mrf.mxu0
  %v2591 = vadd.f32 %v2206, %v2590
  %v2592 = vpop.f32.mrf.mxu0
  %2593 = vdwg.mxu0
  %2594 = vmatpush.bf16.msra.mxu0 %v2432
  %2595 = vmatpush.bf16.msra.mxu0 %v2430
  %2596 = vmatpush.bf16.msra.mxu0 %v2428
  %2597 = vmatpush.bf16.msra.mxu0 %v2426
  %2598 = vmatpush.bf16.msra.mxu0 %v2424
  %2599 = vmatpush.bf16.msra.mxu0 %v2422
  %2600 = vmatpush.bf16.msra.mxu0 %v2420
  %2601 = vmatpush.bf16.msra.mxu0 %v2418
  %2602 = vmatmul.bf16.gmra.mxu0 %v2136
  %v2603 = vpop.f32.mrf.mxu0
  %v2604 = vadd.f32 %v2591, %v2603
  %v2605 = vpop.f32.mrf.mxu0
  %2606 = vdwg.mxu0
  %2607 = vmatpush.bf16.msra.mxu0 %v2448
  %2608 = vmatpush.bf16.msra.mxu0 %v2446
  %2609 = vmatpush.bf16.msra.mxu0 %v2444
  %2610 = vmatpush.bf16.msra.mxu0 %v2442
  %2611 = vmatpush.bf16.msra.mxu0 %v2440
  %2612 = vmatpush.bf16.msra.mxu0 %v2438
  %2613 = vmatpush.bf16.msra.mxu0 %v2436
  %2614 = vmatpush.bf16.msra.mxu0 %v2434
  %2615 = vmatmul.bf16.gmra.mxu0 %v2137
  %v2616 = vpop.f32.mrf.mxu0
  %v2617 = vadd.f32 %v2604, %v2616
  %v2618 = vpop.f32.mrf.mxu0
  %2619 = vdwg.mxu0
  %2620 = vmatpush.bf16.msra.mxu0 %v2464
  %2621 = vmatpush.bf16.msra.mxu0 %v2462
  %2622 = vmatpush.bf16.msra.mxu0 %v2460
  %2623 = vmatpush.bf16.msra.mxu0 %v2458
  %2624 = vmatpush.bf16.msra.mxu0 %v2456
  %2625 = vmatpush.bf16.msra.mxu0 %v2454
  %2626 = vmatpush.bf16.msra.mxu0 %v2452
  %2627 = vmatpush.bf16.msra.mxu0 %v2450
  %2628 = vmatmul.bf16.gmra.mxu0 %v2138
  %v2629 = vpop.f32.mrf.mxu0
  %v2630 = vadd.f32 %v2617, %v2629
  %v2631 = vpop.f32.mrf.mxu0
  %2632 = vdwg.mxu0
  %vm2633 = vcmp.gt.f32.partialorder %v2578, 0.0
  %vm2634 = vcmp.gt.f32.partialorder %v2630, 0.0
  %v2635 = vmul.f32 %v2578, 0.01
  %v2636 = vmul.f32 %v2630, 0.01
  %v2637 = vsel %vm2633, %v2578, %v2635
  %v2638 = vsel %vm2634, %v2630, %v2636
  %v2639 = vld [vmem:[%s7] sm:$0x3]
  %v2641 = vperm.slane %v2639, 0
  %v2642 = vperm.slane %v2639, 1
  %v2645 = vmul.f32 %v2637, %v2641
  %v2646 = vmul.f32 %v2638, %v2642
  %v2647 = vadd.f32 %v2645, %v2646
  %2648 = vadd.xlane.f32.xlu0 %v2647
  %v2649 = vpop.xlane.xlu0 %2648
  %v2650 = vld [vmem:[#allocation2] sm:$0x1]
  %v2652 = vperm.slane %v2650, 0
  %v2654 = vadd.f32 %v2649, %v2652
  %v2655 = vxor.u32 %v2654, 2147483648
  %v2656 = vmul.f32 %v2655, 1.442695
  %v2657 = vpow.pop %v2656
  %v2658 = vadd.f32 %v2657, 1.0
  %v2659 = vrcp.pop %v2658
  %v2660 = vmul.f32 %v2658, %v2659
  %v2661 = vsub.f32 1.0, %v2660
  %v2662 = vmul.f32 %v2659, %v2661
  %v2663 = vadd.f32 %v2659, %v2662
  %vm2664 = vweird.f32 %v2658
  %vm2665 = vweird.f32 %v2659
  %vm2666 = vmor %vm2664, %vm2665
  %v2667 = vsel %vm2666, %v2659, %v2663
  %v2668 = vand.u32 2147483647, %v2658
  %vm2669 = vcmp.eq.f32.partialorder %v2668, 8.507059e+37
  %v2670 = vand.u32 %v2658, 2147483648
  %v2671 = vor.u32 1.1754944e-38, %v2670
  %v2672 = vsel %vm2669, %v2671, %v2667
  %v2673 = vmul.f32 1.0, %v2672
  %vm2674 = vcmask 7168
  %2675 = vst.msk [vmem:[%s9] sm:$0xff] %vm2674, %v2673
  // Predicated region
  $region38: #{discriminator_forward.1} parent=0 // pred_check
    _
  $region39: #{discriminator_forward.1} parent=0 // pred_check_branch
    %2677 = sbr.rel (0) target = $region41
  $region40: #{discriminator_forward.1} parent=0 // pred_region
    _
  $region41: #{discriminator_forward.1} parent=0 // pred_fallthru
    _
  // Predicated region
  $region42: #{discriminator_forward.1} parent=0 // pred_check
    _
  $region43: #{discriminator_forward.1} parent=0 // pred_check_branch
    %2679 = sbr.rel (0) target = $region45
  $region44: #{discriminator_forward.1} parent=0 // pred_region
    _
  $region45: #{discriminator_forward.1} parent=0 // pred_fallthru
    _

</llo_original>
